<compile_context>
chip_gen: v7x
topology: tpu7x:2x2x1
jax: 0.10.0
libtpu: 0.0.40
codegen_flags: <defaults>
</compile_context>

<pallas_src>
import functools
from typing import NamedTuple

import jax
import jax.numpy as jnp
from jax.experimental import pallas as pl
from jax.experimental.pallas import tpu as pltpu


# ----------------------------- Pallas kernels -------------------------------


def _gcn_agg_kernel(*refs, has_w_in, apply_relu, resident_m, tk):
    """out = act( (A @ M) [@ W_in] + b ), tiled over (row tiles, reduction tiles).

    refs = a_ref, m_ref, [w_in_ref], b_ref, o_ref, acc_ref
      a_ref : (tm, tk)            bf16 tile of normalized adjacency
      m_ref : (tk, cm) streamed   OR (n_pad, cm) VMEM-resident feature matrix
      w_in  : (cm, c_out)         optional weight applied after aggregation
      b     : (1, c_out)          f32 bias
      acc   : (tm, cm)            f32 accumulator scratch
    """
    if has_w_in:
        a_ref, m_ref, w_ref, b_ref, o_ref, acc_ref = refs
    else:
        a_ref, m_ref, b_ref, o_ref, acc_ref = refs
        w_ref = None

    k = pl.program_id(1)

    @pl.when(k == 0)
    def _init():
        acc_ref[...] = jnp.zeros_like(acc_ref)

    if resident_m:
        start = pl.multiple_of(k * tk, tk)
        m = m_ref[pl.ds(start, tk), :]
    else:
        m = m_ref[...]
    acc_ref[...] += jnp.dot(a_ref[...], m, preferred_element_type=jnp.float32)

    @pl.when(k == pl.num_programs(1) - 1)
    def _finalize():
        z = acc_ref[...]
        if has_w_in:
            # bf16 x bf16 on the MXU (no f32 promotion) -> f32 result.
            z = jnp.dot(z.astype(jnp.bfloat16), w_ref[...],
                        preferred_element_type=jnp.float32)
        z = z + b_ref[...]
        if apply_relu:
            z = jnp.maximum(z, 0.0)
        o_ref[...] = z.astype(o_ref.dtype)


def _rowblock_matmul_kernel(x_ref, w_ref, o_ref):
    o_ref[...] = jnp.dot(x_ref[...], w_ref[...],
                         preferred_element_type=jnp.float32).astype(o_ref.dtype)


def _dense_matmul(x_p, w_p, *, tm, vmem_limit, out_dtype=jnp.bfloat16):
    """Hoisted X @ W (row-tiled, weight resident). Used for the pre-weight path."""
    n_pad, ci = x_p.shape
    co = w_p.shape[1]
    return pl.pallas_call(
        _rowblock_matmul_kernel,
        out_shape=jax.ShapeDtypeStruct((n_pad, co), out_dtype),
        grid=(n_pad // tm,),
        in_specs=[
            pl.BlockSpec((tm, ci), lambda i: (i, 0)),
            pl.BlockSpec((ci, co), lambda i: (0, 0)),
        ],
        out_specs=pl.BlockSpec((tm, co), lambda i: (i, 0)),
        compiler_params=pltpu.CompilerParams(
            dimension_semantics=("parallel",),
            vmem_limit_bytes=vmem_limit,
        ),
    )(x_p, w_p)


def _gcn_aggregate(a_p, m_p, w_in, b_p, *, apply_relu, out_dtype, tm, tk,
                   vmem_limit, resident_budget):
    """One GCNConv aggregation layer as a single pallas_call with a 2-D grid."""
    n_pad = a_p.shape[0]
    cm = m_p.shape[1]
    c_out = w_in.shape[1] if w_in is not None else cm
    out_bytes = jnp.dtype(out_dtype).itemsize
    grid = (n_pad // tm, n_pad // tk)

    # Decide whether the streamed feature matrix should be fully VMEM-resident.
    m_bytes = n_pad * cm * 2
    resident = (grid[0] > 1 and grid[1] > 1 and m_bytes <= resident_budget)
    est = (2 * tm * tk * 2                                    # A double-buffer
           + (2 * m_bytes if resident else 2 * tk * cm * 2)   # features
           + tm * cm * 4                                      # f32 accumulator
           + 2 * tm * c_out * out_bytes                       # output dbl-buf
           + cm * c_out * 2 + c_out * 4)                      # weights / bias
    if resident and est > vmem_limit - (4 << 20):
        resident = False

    has_w_in = w_in is not None
    kernel = functools.partial(_gcn_agg_kernel, has_w_in=has_w_in,
                               apply_relu=apply_relu, resident_m=resident,
                               tk=tk)

    in_specs = [pl.BlockSpec((tm, tk), lambda i, k: (i, k))]
    args = [a_p]
    if resident:
        in_specs.append(pl.BlockSpec((n_pad, cm), lambda i, k: (0, 0)))
    else:
        in_specs.append(pl.BlockSpec((tk, cm), lambda i, k: (k, 0)))
    args.append(m_p)
    if has_w_in:
        in_specs.append(pl.BlockSpec((cm, c_out), lambda i, k: (0, 0)))
        args.append(w_in)
    in_specs.append(pl.BlockSpec((1, c_out), lambda i, k: (0, 0)))
    args.append(b_p)

    return pl.pallas_call(
        kernel,
        out_shape=jax.ShapeDtypeStruct((n_pad, c_out), out_dtype),
        grid=grid,
        in_specs=in_specs,
        out_specs=pl.BlockSpec((tm, c_out), lambda i, k: (i, 0)),
        scratch_shapes=[pltpu.VMEM((tm, cm), jnp.float32)],
        compiler_params=pltpu.CompilerParams(
            dimension_semantics=("parallel", "arbitrary"),
            vmem_limit_bytes=vmem_limit,
        ),
    )(*args)


# --------------------------- planning / padding ------------------------------


def _round_up(x, m):
    return (x + m - 1) // m * m


def _pick_tm(n_pad):
    divs = [c for c in (128, 256, 512) if n_pad % c == 0]
    multi = [c for c in divs if n_pad // c >= 2]   # keep both v7x TCs busy
    return max(multi) if multi else max(divs)


def _pick_tk(n_pad):
    cands = [c for c in (128, 256, 512, 1024, 2048) if n_pad % c == 0]
    if n_pad <= 2048:
        cands.append(n_pad)
    return max(cands)


def _hw_budgets():
    """(vmem_limit_bytes, resident_feature_budget_bytes) per TPU generation."""
    cap = 128 * 1024 * 1024
    try:
        info = pltpu.get_tpu_info()
        cap = int(getattr(info, "vmem_capacity_bytes", cap))
    except Exception:
        pass
    if cap >= 96 * 1024 * 1024:          # v5e / v6e: 128 MiB VMEM
        return 80 * 1024 * 1024, 48 * 1024 * 1024
    return 44 * 1024 * 1024, 16 * 1024 * 1024   # v7x: 64 MiB per TensorCore


class GCNPlan(NamedTuple):
    n: int
    c_in: int
    c_hidden: int
    c_out: int
    n_pad: int
    ci: int
    ch: int
    co: int
    tm: int
    tk: int
    l1_after: bool   # layer 1: apply W1 after aggregation (stream X)
    l2_after: bool   # layer 2: apply W2 after aggregation (stream H)
    vmem_limit: int
    resident_budget: int


def make_plan(n, c_in, c_hidden, c_out):
    n_pad = _round_up(max(n, 128), 128)
    ci, ch, co = (_round_up(c, 128) for c in (c_in, c_hidden, c_out))
    vmem_limit, resident_budget = _hw_budgets()
    # Decide the contraction order from PADDED widths (they set the real cost).
    return GCNPlan(n, c_in, c_hidden, c_out, n_pad, ci, ch, co,
                   _pick_tm(n_pad), _pick_tk(n_pad),
                   l1_after=(ci <= ch), l2_after=(ch <= co),
                   vmem_limit=vmem_limit, resident_budget=resident_budget)


def pad_adjacency(a_norm, plan):
    """Padded bf16 A_norm. Compute ONCE per graph; reuse across forward calls."""
    bf = jnp.bfloat16
    return (jnp.zeros((plan.n_pad, plan.n_pad), bf)
            .at[:plan.n, :plan.n].set(a_norm.astype(bf)))


def pad_params(w1, b1, w2, b2, plan):
    """Padded bf16 weights / f32 biases. Compute ONCE; reuse across calls."""
    bf = jnp.bfloat16
    w1_p = (jnp.zeros((plan.ci, plan.ch), bf)
            .at[:plan.c_in, :plan.c_hidden].set(w1.astype(bf)))
    b1_p = (jnp.zeros((1, plan.ch), jnp.float32)
            .at[:, :plan.c_hidden].set(jnp.reshape(b1, (1, -1))))
    w2_p = (jnp.zeros((plan.ch, plan.co), bf)
            .at[:plan.c_hidden, :plan.c_out].set(w2.astype(bf)))
    b2_p = (jnp.zeros((1, plan.co), jnp.float32)
            .at[:, :plan.c_out].set(jnp.reshape(b2, (1, -1))))
    return w1_p, b1_p, w2_p, b2_p


def make_forward(plan):
    """Jitted 2-layer GCN forward on pre-padded A / params (only X padded per call)."""
    p = plan

    def fwd(a_p, x, w1_p, b1_p, w2_p, b2_p):
        bf = jnp.bfloat16
        x_p = (jnp.zeros((p.n_pad, p.ci), bf)
               .at[:p.n, :p.c_in].set(x.astype(bf)))

        # ---- layer 1: GCNConv(c_in -> c_hidden) + ReLU ----
        if p.l1_after:
            m1, w_in1 = x_p, w1_p
        else:
            # Hoist X@W1 out of the reduction loop (one row-tiled matmul).
            m1 = _dense_matmul(x_p, w1_p, tm=p.tm, vmem_limit=p.vmem_limit)
            w_in1 = None
        h_p = _gcn_aggregate(a_p, m1, w_in1, b1_p, apply_relu=True,
                             out_dtype=bf, tm=p.tm, tk=p.tk,
                             vmem_limit=p.vmem_limit,
                             resident_budget=p.resident_budget)

        # ---- layer 2: GCNConv(c_hidden -> c_out) ----
        if p.l2_after:
            m2, w_in2 = h_p, w2_p
        else:
            m2 = _dense_matmul(h_p, w2_p, tm=p.tm, vmem_limit=p.vmem_limit)
            w_in2 = None
        out_p = _gcn_aggregate(a_p, m2, w_in2, b2_p, apply_relu=False,
                               out_dtype=jnp.float32, tm=p.tm, tk=p.tk,
                               vmem_limit=p.vmem_limit,
                               resident_budget=p.resident_budget)
        return out_p[:p.n, :p.c_out]

    return jax.jit(fwd)


# ------------------------------- glue / test --------------------------------


def build_normalized_adjacency(edge_index, num_nodes):
    """Dense D^-1/2 (A + I) D^-1/2 from edge_index (2, E), PyG GCNConv convention:
    edge_index[0] = source, edge_index[1] = target; message flows src -> dst."""
    src, dst = edge_index[0], edge_index[1]
    adj = jnp.zeros((num_nodes, num_nodes), jnp.float32)
    adj = adj.at[dst, src].add(1.0)
    adj = adj + jnp.eye(num_nodes, dtype=jnp.float32)  # self loops
    deg = jnp.sum(adj, axis=1)
    dinv = jnp.where(deg > 0, 1.0 / jnp.sqrt(deg), 0.0)
    return dinv[:, None] * adj * dinv[None, :]


def init_params(key, c_in, c_hidden, c_out):
    """Deterministic Glorot-style init for the two GCNConv layers."""
    k1, k2 = jax.random.split(key)
    s1 = jnp.sqrt(6.0 / (c_in + c_hidden))
    s2 = jnp.sqrt(6.0 / (c_hidden + c_out))
    w1 = jax.random.uniform(k1, (c_in, c_hidden), jnp.float32, -s1, s1)
    w2 = jax.random.uniform(k2, (c_hidden, c_out), jnp.float32, -s2, s2)
    b1 = jnp.zeros((1, c_hidden), jnp.float32)
    b2 = jnp.zeros((1, c_out), jnp.float32)
    return w1, b1, w2, b2


def reference_forward(a, x, w1, b1, w2, b2, plan):
    """Pure-JAX reference that mirrors the kernel's bf16 rounding points."""
    up = lambda v: v.astype(jnp.bfloat16).astype(jnp.float32)
    with jax.default_matmul_precision("highest"):
        a_, x_, w1_, w2_ = up(a), up(x), up(w1), up(w2)
        z1 = (up(a_ @ x_) @ w1_) if plan.l1_after else (a_ @ up(x_ @ w1_))
        h = up(jnp.maximum(z1 + b1, 0.0))
        z2 = (up(a_ @ h) @ w2_) if plan.l2_after else (a_ @ up(h @ w2_))
        return z2 + b2


def _run_case(key, n, c_in, c_hidden, c_out, n_edges):
    kx, kp, ke = jax.random.split(key, 3)
    x = jax.random.normal(kx, (n, c_in), jnp.float32)
    edge_index = jax.random.randint(ke, (2, n_edges), 0, n, dtype=jnp.int32)
    a_norm = build_normalized_adjacency(edge_index, n)
    w1, b1, w2, b2 = init_params(kp, c_in, c_hidden, c_out)

    plan = make_plan(n, c_in, c_hidden, c_out)
    a_p = pad_adjacency(a_norm, plan)                 # once per graph
    w1_p, b1_p, w2_p, b2_p = pad_params(w1, b1, w2, b2, plan)  # once per params
    fwd = make_forward(plan)

    out = jax.block_until_ready(fwd(a_p, x, w1_p, b1_p, w2_p, b2_p))
    ref = reference_forward(a_norm, x, w1, b1, w2, b2, plan)

    assert out.shape == (n, c_out), out.shape
    err = float(jnp.max(jnp.abs(out - ref)))
    assert jnp.allclose(out, ref, atol=1e-2, rtol=1e-2), err
    return err


if __name__ == "__main__":
    key = jax.random.PRNGKey(0)
    k_a, k_b = jax.random.split(key)

    # Case A: module-default-ish shapes -> both layers use the "W after
    # aggregation" path (all padded feature widths equal 128).
    _run_case(k_a, n=16, c_in=8, c_hidden=32, c_out=4, n_edges=24)

    # Case B: wider features -> both layers use the hoisted X@W (pre-weight)
    # path, exercising the _dense_matmul kernel as well.
    _run_case(k_b, n=24, c_in=300, c_hidden=200, c_out=4, n_edges=40)

    print("KERNEL_OK")
</pallas_src>

<mosaic_0001>
module attributes {stable_mosaic.version = 11 : i64} {
  func.func @_gcn_agg_kernel(%arg0: i32, %arg1: i32, %arg2: memref<128x128xbf16, #tpu.memory_space<vmem>>, %arg3: memref<128x128xbf16, #tpu.memory_space<vmem>>, %arg4: memref<128x128xbf16, #tpu.memory_space<vmem>>, %arg5: memref<1x128xf32, #tpu.memory_space<vmem>>, %arg6: memref<128x128xbf16, #tpu.memory_space<vmem>>, %arg7: memref<128x128xf32, #tpu.memory_space<vmem>>) attributes {dimension_semantics = [#tpu.dimension_semantics<parallel>, #tpu.dimension_semantics<arbitrary>], iteration_bounds = array<i64: 1, 1>, scalar_prefetch = 0 : i64, scratch_operands = 1 : i64, tpu.core_type = #tpu.core_type<tc>, window_params = [{transform_indices = @transform_0, window_bounds = array<i64: 128, 128>}, {transform_indices = @transform_1, window_bounds = array<i64: 128, 128>}, {pipeline_mode = #tpu.pipeline_mode<synchronous>, transform_indices = @transform_2, window_bounds = array<i64: 128, 128>}, {pipeline_mode = #tpu.pipeline_mode<synchronous>, transform_indices = @transform_3, window_bounds = array<i64: 1, 128>}, {transform_indices = @transform_4, window_bounds = array<i64: 128, 128>}]} {
    %c0_i32 = arith.constant 0 : i32
    %0 = arith.cmpi eq, %arg1, %c0_i32 : i32
    %1 = arith.extui %0 : i1 to i32
    %c0_i32_0 = arith.constant 0 : i32
    %2 = arith.cmpi ne, %1, %c0_i32_0 : i32
    scf.if %2 {
      %cst_10 = arith.constant 0.000000e+00 : f32
      %12 = vector.broadcast %cst_10 : f32 to vector<128x128xf32>
      %c0_11 = arith.constant 0 : index
      %c0_12 = arith.constant 0 : index
      %13 = vector.load %arg7[%c0_11, %c0_12] : memref<128x128xf32, #tpu.memory_space<vmem>>, vector<128x128xf32>
      tpu.vector_store %arg7[%c0_11, %c0_12], %12 {strides = array<i32>} : memref<128x128xf32, #tpu.memory_space<vmem>>, vector<128x128xf32>,
    } else {
    }
    %c0 = arith.constant 0 : index
    %c0_1 = arith.constant 0 : index
    %3 = vector.load %arg3[%c0, %c0_1] : memref<128x128xbf16, #tpu.memory_space<vmem>>, vector<128x128xbf16>
    %c0_2 = arith.constant 0 : index
    %c0_3 = arith.constant 0 : index
    %4 = vector.load %arg7[%c0_2, %c0_3] : memref<128x128xf32, #tpu.memory_space<vmem>>, vector<128x128xf32>
    %c0_4 = arith.constant 0 : index
    %c0_5 = arith.constant 0 : index
    %5 = vector.load %arg2[%c0_4, %c0_5] : memref<128x128xbf16, #tpu.memory_space<vmem>>, vector<128x128xbf16>
    %cst = arith.constant dense<0.000000e+00> : vector<128x128xf32>
    %6 = tpu.matmul %5, %3, %cst {dimension_numbers = #tpu.dot_dimension_numbers<[1], [0], [0], [1], [0, 0, 1, 1], [], []>} : vector<128x128xbf16>, vector<128x128xbf16>, vector<128x128xf32> -> vector<128x128xf32>
    %7 = arith.addf %4, %6 : vector<128x128xf32>
    %c0_6 = arith.constant 0 : index
    %c0_7 = arith.constant 0 : index
    %8 = vector.load %arg7[%c0_6, %c0_7] : memref<128x128xf32, #tpu.memory_space<vmem>>, vector<128x128xf32>
    tpu.vector_store %arg7[%c0_6, %c0_7], %7 {strides = array<i32>} : memref<128x128xf32, #tpu.memory_space<vmem>>, vector<128x128xf32>,
    %c0_i32_8 = arith.constant 0 : i32
    %9 = arith.cmpi eq, %arg1, %c0_i32_8 : i32
    %10 = arith.extui %9 : i1 to i32
    %c0_i32_9 = arith.constant 0 : i32
    %11 = arith.cmpi ne, %10, %c0_i32_9 : i32
    scf.if %11 {
      %c0_10 = arith.constant 0 : index
      %c0_11 = arith.constant 0 : index
      %12 = vector.load %arg7[%c0_10, %c0_11] : memref<128x128xf32, #tpu.memory_space<vmem>>, vector<128x128xf32>
      %13 = arith.truncf %12 : vector<128x128xf32> to vector<128x128xbf16>
      %c0_12 = arith.constant 0 : index
      %c0_13 = arith.constant 0 : index
      %14 = vector.load %arg4[%c0_12, %c0_13] : memref<128x128xbf16, #tpu.memory_space<vmem>>, vector<128x128xbf16>
      %cst_14 = arith.constant dense<0.000000e+00> : vector<128x128xf32>
      %15 = tpu.matmul %13, %14, %cst_14 {dimension_numbers = #tpu.dot_dimension_numbers<[1], [0], [0], [1], [0, 0, 1, 1], [], []>} : vector<128x128xbf16>, vector<128x128xbf16>, vector<128x128xf32> -> vector<128x128xf32>
      %c0_15 = arith.constant 0 : index
      %c0_16 = arith.constant 0 : index
      %16 = vector.load %arg5[%c0_15, %c0_16] : memref<1x128xf32, #tpu.memory_space<vmem>>, vector<1x128xf32>
      %17 = vector.broadcast %16 : vector<1x128xf32> to vector<128x128xf32>
      %18 = arith.addf %15, %17 : vector<128x128xf32>
      %cst_17 = arith.constant 0.000000e+00 : f32
      %19 = vector.broadcast %cst_17 : f32 to vector<128x128xf32>
      %20 = arith.maximumf %18, %19 : vector<128x128xf32>
      %21 = arith.truncf %20 : vector<128x128xf32> to vector<128x128xbf16>
      %c0_18 = arith.constant 0 : index
      %c0_19 = arith.constant 0 : index
      %22 = vector.load %arg6[%c0_18, %c0_19] : memref<128x128xbf16, #tpu.memory_space<vmem>>, vector<128x128xbf16>
      tpu.vector_store %arg6[%c0_18, %c0_19], %21 {strides = array<i32>} : memref<128x128xbf16, #tpu.memory_space<vmem>>, vector<128x128xbf16>,
    } else {
    }
    return
  }
  func.func @transform_0(%arg0: i32, %arg1: i32) -> (i32, i32) {
    %c0_i32 = arith.constant 0 : i32
    return %arg0, %arg1 : i32, i32
  }
  func.func @transform_1(%arg0: i32, %arg1: i32) -> (i32, i32) {
    %c0_i32 = arith.constant 0 : i32
    %c0_i32_0 = arith.constant 0 : i32
    return %arg1, %c0_i32 : i32, i32
  }
  func.func @transform_2(%arg0: i32, %arg1: i32) -> (i32, i32) {
    %c0_i32 = arith.constant 0 : i32
    %c0_i32_0 = arith.constant 0 : i32
    %c0_i32_1 = arith.constant 0 : i32
    return %c0_i32, %c0_i32_0 : i32, i32
  }
  func.func @transform_3(%arg0: i32, %arg1: i32) -> (i32, i32) {
    %c0_i32 = arith.constant 0 : i32
    %c0_i32_0 = arith.constant 0 : i32
    %c0_i32_1 = arith.constant 0 : i32
    return %c0_i32, %c0_i32_0 : i32, i32
  }
  func.func @transform_4(%arg0: i32, %arg1: i32) -> (i32, i32) {
    %c0_i32 = arith.constant 0 : i32
    %c0_i32_0 = arith.constant 0 : i32
    return %arg0, %c0_i32 : i32, i32
  }
}

module attributes {stable_mosaic.version = 11 : i64} {
  func.func @_gcn_agg_kernel(%arg0: i32, %arg1: i32, %arg2: memref<128x128xbf16, #tpu.memory_space<vmem>>, %arg3: memref<128x128xbf16, #tpu.memory_space<vmem>>, %arg4: memref<128x128xbf16, #tpu.memory_space<vmem>>, %arg5: memref<1x128xf32, #tpu.memory_space<vmem>>, %arg6: memref<128x128xf32, #tpu.memory_space<vmem>>, %arg7: memref<128x128xf32, #tpu.memory_space<vmem>>) attributes {dimension_semantics = [#tpu.dimension_semantics<parallel>, #tpu.dimension_semantics<arbitrary>], iteration_bounds = array<i64: 1, 1>, scalar_prefetch = 0 : i64, scratch_operands = 1 : i64, tpu.core_type = #tpu.core_type<tc>, window_params = [{transform_indices = @transform_0, window_bounds = array<i64: 128, 128>}, {transform_indices = @transform_1, window_bounds = array<i64: 128, 128>}, {pipeline_mode = #tpu.pipeline_mode<synchronous>, transform_indices = @transform_2, window_bounds = array<i64: 128, 128>}, {pipeline_mode = #tpu.pipeline_mode<synchronous>, transform_indices = @transform_3, window_bounds = array<i64: 1, 128>}, {transform_indices = @transform_4, window_bounds = array<i64: 128, 128>}]} {
    %c0_i32 = arith.constant 0 : i32
    %0 = arith.cmpi eq, %arg1, %c0_i32 : i32
    %1 = arith.extui %0 : i1 to i32
    %c0_i32_0 = arith.constant 0 : i32
    %2 = arith.cmpi ne, %1, %c0_i32_0 : i32
    scf.if %2 {
      %cst_10 = arith.constant 0.000000e+00 : f32
      %12 = vector.broadcast %cst_10 : f32 to vector<128x128xf32>
      %c0_11 = arith.constant 0 : index
      %c0_12 = arith.constant 0 : index
      %13 = vector.load %arg7[%c0_11, %c0_12] : memref<128x128xf32, #tpu.memory_space<vmem>>, vector<128x128xf32>
      tpu.vector_store %arg7[%c0_11, %c0_12], %12 {strides = array<i32>} : memref<128x128xf32, #tpu.memory_space<vmem>>, vector<128x128xf32>,
    } else {
    }
    %c0 = arith.constant 0 : index
    %c0_1 = arith.constant 0 : index
    %3 = vector.load %arg3[%c0, %c0_1] : memref<128x128xbf16, #tpu.memory_space<vmem>>, vector<128x128xbf16>
    %c0_2 = arith.constant 0 : index
    %c0_3 = arith.constant 0 : index
    %4 = vector.load %arg7[%c0_2, %c0_3] : memref<128x128xf32, #tpu.memory_space<vmem>>, vector<128x128xf32>
    %c0_4 = arith.constant 0 : index
    %c0_5 = arith.constant 0 : index
    %5 = vector.load %arg2[%c0_4, %c0_5] : memref<128x128xbf16, #tpu.memory_space<vmem>>, vector<128x128xbf16>
    %cst = arith.constant dense<0.000000e+00> : vector<128x128xf32>
    %6 = tpu.matmul %5, %3, %cst {dimension_numbers = #tpu.dot_dimension_numbers<[1], [0], [0], [1], [0, 0, 1, 1], [], []>} : vector<128x128xbf16>, vector<128x128xbf16>, vector<128x128xf32> -> vector<128x128xf32>
    %7 = arith.addf %4, %6 : vector<128x128xf32>
    %c0_6 = arith.constant 0 : index
    %c0_7 = arith.constant 0 : index
    %8 = vector.load %arg7[%c0_6, %c0_7] : memref<128x128xf32, #tpu.memory_space<vmem>>, vector<128x128xf32>
    tpu.vector_store %arg7[%c0_6, %c0_7], %7 {strides = array<i32>} : memref<128x128xf32, #tpu.memory_space<vmem>>, vector<128x128xf32>,
    %c0_i32_8 = arith.constant 0 : i32
    %9 = arith.cmpi eq, %arg1, %c0_i32_8 : i32
    %10 = arith.extui %9 : i1 to i32
    %c0_i32_9 = arith.constant 0 : i32
    %11 = arith.cmpi ne, %10, %c0_i32_9 : i32
    scf.if %11 {
      %c0_10 = arith.constant 0 : index
      %c0_11 = arith.constant 0 : index
      %12 = vector.load %arg7[%c0_10, %c0_11] : memref<128x128xf32, #tpu.memory_space<vmem>>, vector<128x128xf32>
      %13 = arith.truncf %12 : vector<128x128xf32> to vector<128x128xbf16>
      %c0_12 = arith.constant 0 : index
      %c0_13 = arith.constant 0 : index
      %14 = vector.load %arg4[%c0_12, %c0_13] : memref<128x128xbf16, #tpu.memory_space<vmem>>, vector<128x128xbf16>
      %cst_14 = arith.constant dense<0.000000e+00> : vector<128x128xf32>
      %15 = tpu.matmul %13, %14, %cst_14 {dimension_numbers = #tpu.dot_dimension_numbers<[1], [0], [0], [1], [0, 0, 1, 1], [], []>} : vector<128x128xbf16>, vector<128x128xbf16>, vector<128x128xf32> -> vector<128x128xf32>
      %c0_15 = arith.constant 0 : index
      %c0_16 = arith.constant 0 : index
      %16 = vector.load %arg5[%c0_15, %c0_16] : memref<1x128xf32, #tpu.memory_space<vmem>>, vector<1x128xf32>
      %17 = vector.broadcast %16 : vector<1x128xf32> to vector<128x128xf32>
      %18 = arith.addf %15, %17 : vector<128x128xf32>
      %c0_17 = arith.constant 0 : index
      %c0_18 = arith.constant 0 : index
      %19 = vector.load %arg6[%c0_17, %c0_18] : memref<128x128xf32, #tpu.memory_space<vmem>>, vector<128x128xf32>
      tpu.vector_store %arg6[%c0_17, %c0_18], %18 {strides = array<i32>} : memref<128x128xf32, #tpu.memory_space<vmem>>, vector<128x128xf32>,
    } else {
    }
    return
  }
  func.func @transform_0(%arg0: i32, %arg1: i32) -> (i32, i32) {
    %c0_i32 = arith.constant 0 : i32
    return %arg0, %arg1 : i32, i32
  }
  func.func @transform_1(%arg0: i32, %arg1: i32) -> (i32, i32) {
    %c0_i32 = arith.constant 0 : i32
    %c0_i32_0 = arith.constant 0 : i32
    return %arg1, %c0_i32 : i32, i32
  }
  func.func @transform_2(%arg0: i32, %arg1: i32) -> (i32, i32) {
    %c0_i32 = arith.constant 0 : i32
    %c0_i32_0 = arith.constant 0 : i32
    %c0_i32_1 = arith.constant 0 : i32
    return %c0_i32, %c0_i32_0 : i32, i32
  }
  func.func @transform_3(%arg0: i32, %arg1: i32) -> (i32, i32) {
    %c0_i32 = arith.constant 0 : i32
    %c0_i32_0 = arith.constant 0 : i32
    %c0_i32_1 = arith.constant 0 : i32
    return %c0_i32, %c0_i32_0 : i32, i32
  }
  func.func @transform_4(%arg0: i32, %arg1: i32) -> (i32, i32) {
    %c0_i32 = arith.constant 0 : i32
    %c0_i32_0 = arith.constant 0 : i32
    return %arg0, %c0_i32 : i32, i32
  }
}

</mosaic_0001>

<llo_original>
// kernel: fwd.3
$region0: #{fwd.3}
  #allocation0 [shape = 'u32[]', space=smem, size = 0x4, offset = 0x4, fixed_abs, tag = 'smem constant byte address 0x4 - core index']
  #allocation1 [shape = 'u32[144,128]{1,0:T(1,128)}', space=vmem, size = 0x12000, scoped, tag = 'internal scratch']
  #allocation2 [shape = 'f32[128,128]{1,0:T(8,128)}', space=vmem, size = 0x10000, scoped, tag = 'scratch operand']
  %s0 = inlined_call_operand.hbm [shape: bf16[128,128], index: 0, kind: input, shape index: {}]
  %s1 = inlined_call_operand.hbm [shape: bf16[128,128], index: 1, kind: input, shape index: {}]
  %s2 = inlined_call_operand.hbm [shape: bf16[128,128], index: 2, kind: input, shape index: {}]
  %s3 = inlined_call_operand.hbm [shape: f32[1,128], index: 3, kind: input, shape index: {}]
  %s4 = inlined_call_operand.hbm [shape: f32[128,128], index: 4, kind: output, shape index: {}]
  %s5 = sld [smem:[#allocation0]]
  $region50: #{fwd.3} parent=0
    _
  %s7 = ssub.s32 1, %s5
  %s8 = scalar_select 0, %s7, %s5
  $region1: #{fwd.3} parent=0
    #allocation3 [shape = 'u8[32768]{0}', space=vmem, size = 0x8000, scoped, tag = 'input window, operand 0, single buffered']
    #allocation4 [shape = 's32[1]{0}', space=sflag, size = 0x4, scoped, tag = 'scoped memory for fwd.3']
    #allocation5 [shape = 's32[1]{0}', space=sflag, size = 0x4, scoped, tag = 'scoped memory for fwd.3']
    #allocation6 [shape = 'u8[32768]{0}', space=vmem, size = 0x8000, scoped, tag = 'input window, operand 1, single buffered']
    #allocation7 [shape = 's32[1]{0}', space=sflag, size = 0x4, scoped, tag = 'scoped memory for fwd.3']
    #allocation8 [shape = 'u8[32768]{0}', space=vmem, size = 0x8000, scoped, tag = 'input window, operand 2, single buffered']
    #allocation9 [shape = 'u8[512]{0}', space=vmem, size = 0x400, scoped, tag = 'input window, operand 3, single buffered']
    #allocation10 [shape = 's32[1]{0}', space=sflag, size = 0x4, scoped, tag = 'scoped memory for fwd.3']
    #allocation11 [shape = 'u8[65536]{0}', space=vmem, size = 0x10000, scoped, tag = 'output window, operand 0, single buffered']
    %9 = vsyncpa [#allocation4], 0
    %10 = vsyncpa [#allocation7], 0
    %11 = vsyncpa [#allocation10], 0
    %12 = vsyncpa [#allocation5], 0
    // Predicated region
    $region2: #{fwd.3} parent=1 // pred_check
      _
    $region3: #{fwd.3} parent=1 // pred_check_branch
      %14 = sbr.rel (0) target = $region5
    $region4: #{fwd.3} parent=1 // pred_region
      %s16 = ssub.s32 1024, 1024
      %17 = vsyncadd [#allocation4], %s16
      %s18 = sshll.u32 [#allocation3], 4
      %s19 = int_to_ptr.vmem [resolvable:$true] %s18
      %24 = dma.hbm_to_vmem [thread:$0]  %s0, 1024, %s19, [#allocation4], 64, 64, 4
    $region5: #{fwd.3} parent=1 // pred_fallthru
      _
    // Predicated region
    $region6: #{fwd.3} parent=1 // pred_check
      _
    $region7: #{fwd.3} parent=1 // pred_check_branch
      %26 = sbr.rel (0) target = $region9
    $region8: #{fwd.3} parent=1 // pred_region
      %s28 = ssub.s32 1024, 1024
      %29 = vsyncadd [#allocation7], %s28
      %s30 = sshll.u32 [#allocation6], 4
      %s31 = int_to_ptr.vmem [resolvable:$true] %s30
      %36 = dma.hbm_to_vmem [thread:$0]  %s1, 1024, %s31, [#allocation7], 64, 64, 4
    $region9: #{fwd.3} parent=1 // pred_fallthru
      _
    // Predicated region
    $region10: #{fwd.3} parent=1 // pred_check
      _
    $region11: #{fwd.3} parent=1 // pred_check_branch
      %38 = sbr.rel (0) target = $region13
    $region12: #{fwd.3} parent=1 // pred_region
      %s40 = ssub.s32 1024, 1024
      %41 = vsyncadd [#allocation7], %s40
      %s42 = sshll.u32 [#allocation8], 4
      %s43 = int_to_ptr.vmem [resolvable:$true] %s42
      %48 = dma.hbm_to_vmem [thread:$0]  %s2, 1024, %s43, [#allocation7], 64, 64, 4
    $region13: #{fwd.3} parent=1 // pred_fallthru
      _
    // Predicated region
    $region14: #{fwd.3} parent=1 // pred_check
      _
    $region15: #{fwd.3} parent=1 // pred_check_branch
      %50 = sbr.rel (0) target = $region17
    $region16: #{fwd.3} parent=1 // pred_region
      %s52 = ssub.s32 16, 16
      %53 = vsyncadd [#allocation10], %s52
      %s55 = sshll.u32 [#allocation9], 4
      %s56 = int_to_ptr.vmem [resolvable:$true] %s55
      %58 = dma.hbm_to_vmem [thread:$0]  %s3, 16, %s56, [#allocation10]
    $region17: #{fwd.3} parent=1 // pred_fallthru
      _
    // Predicated region
    $region18: #{fwd.3} parent=1 // pred_check
      _
    $region19: #{fwd.3} parent=1 // pred_check_branch
      %60 = sbr.rel (0) target = $region21
    $region20: #{fwd.3} parent=1 // pred_region
      %61 = dma.done [#allocation4], 1024
    $region21: #{fwd.3} parent=1 // pred_fallthru
      _
    // Predicated region
    $region22: #{fwd.3} parent=1 // pred_check
      _
    $region23: #{fwd.3} parent=1 // pred_check_branch
      %63 = sbr.rel (0) target = $region25
    $region24: #{fwd.3} parent=1 // pred_region
      %64 = dma.done [#allocation7], 1024
    $region25: #{fwd.3} parent=1 // pred_fallthru
      _
    // Predicated region
    $region26: #{fwd.3} parent=1 // pred_check
      _
    $region27: #{fwd.3} parent=1 // pred_check_branch
      %66 = sbr.rel (0) target = $region29
    $region28: #{fwd.3} parent=1 // pred_region
      %67 = dma.done [#allocation7], 1024
    $region29: #{fwd.3} parent=1 // pred_fallthru
      _
    // Predicated region
    $region30: #{fwd.3} parent=1 // pred_check
      _
    $region31: #{fwd.3} parent=1 // pred_check_branch
      %69 = sbr.rel (0) target = $region33
    $region32: #{fwd.3} parent=1 // pred_region
      %70 = dma.done [#allocation10], 16
    $region33: #{fwd.3} parent=1 // pred_fallthru
      _
    %p72 = scmp.eq.s32.totalorder 0, 0
    // Predicated region
    $region34: #{fwd.3} parent=1 // pred_check
      %p73 = pneg %p72
    $region35: #{fwd.3} parent=1 // pred_check_branch
      %75 = sbr.rel (%p73) target = $region37
    $region36: #{fwd.3} parent=1 // pred_region
      %76 = vst [vmem:[#allocation2] sm:$0xff] 0.0
      %77 = vst [vmem:[#allocation2 + $0x8] sm:$0xff] 0.0
      %78 = vst [vmem:[#allocation2 + $0x10] sm:$0xff] 0.0
      %79 = vst [vmem:[#allocation2 + $0x18] sm:$0xff] 0.0
      %80 = vst [vmem:[#allocation2 + $0x20] sm:$0xff] 0.0
      %81 = vst [vmem:[#allocation2 + $0x28] sm:$0xff] 0.0
      %82 = vst [vmem:[#allocation2 + $0x30] sm:$0xff] 0.0
      %83 = vst [vmem:[#allocation2 + $0x38] sm:$0xff] 0.0
      %84 = vst [vmem:[#allocation2 + $0x40] sm:$0xff] 0.0
      %85 = vst [vmem:[#allocation2 + $0x48] sm:$0xff] 0.0
      %86 = vst [vmem:[#allocation2 + $0x50] sm:$0xff] 0.0
      %87 = vst [vmem:[#allocation2 + $0x58] sm:$0xff] 0.0
      %88 = vst [vmem:[#allocation2 + $0x60] sm:$0xff] 0.0
      %89 = vst [vmem:[#allocation2 + $0x68] sm:$0xff] 0.0
      %90 = vst [vmem:[#allocation2 + $0x70] sm:$0xff] 0.0
      %91 = vst [vmem:[#allocation2 + $0x78] sm:$0xff] 0.0
    $region37: #{fwd.3} parent=1 // pred_fallthru
      _
    %v92 = vld [vmem:[#allocation6] sm:$0xf]
    %v93 = vld [vmem:[#allocation6 + $0x4] sm:$0xf]
    %v94 = vld [vmem:[#allocation6 + $0x8] sm:$0xf]
    %v95 = vld [vmem:[#allocation6 + $0xc] sm:$0xf]
    %v96 = vld [vmem:[#allocation6 + $0x10] sm:$0xf]
    %v97 = vld [vmem:[#allocation6 + $0x14] sm:$0xf]
    %v98 = vld [vmem:[#allocation6 + $0x18] sm:$0xf]
    %v99 = vld [vmem:[#allocation6 + $0x1c] sm:$0xf]
    %v100 = vld [vmem:[#allocation6 + $0x20] sm:$0xf]
    %v101 = vld [vmem:[#allocation6 + $0x24] sm:$0xf]
    %v102 = vld [vmem:[#allocation6 + $0x28] sm:$0xf]
    %v103 = vld [vmem:[#allocation6 + $0x2c] sm:$0xf]
    %v104 = vld [vmem:[#allocation6 + $0x30] sm:$0xf]
    %v105 = vld [vmem:[#allocation6 + $0x34] sm:$0xf]
    %v106 = vld [vmem:[#allocation6 + $0x38] sm:$0xf]
    %v107 = vld [vmem:[#allocation6 + $0x3c] sm:$0xf]
    %v108 = vld [vmem:[#allocation2] sm:$0xff]
    %v109 = vld [vmem:[#allocation2 + $0x8] sm:$0xff]
    %v110 = vld [vmem:[#allocation2 + $0x10] sm:$0xff]
    %v111 = vld [vmem:[#allocation2 + $0x18] sm:$0xff]
    %v112 = vld [vmem:[#allocation2 + $0x20] sm:$0xff]
    %v113 = vld [vmem:[#allocation2 + $0x28] sm:$0xff]
    %v114 = vld [vmem:[#allocation2 + $0x30] sm:$0xff]
    %v115 = vld [vmem:[#allocation2 + $0x38] sm:$0xff]
    %v116 = vld [vmem:[#allocation2 + $0x40] sm:$0xff]
    %v117 = vld [vmem:[#allocation2 + $0x48] sm:$0xff]
    %v118 = vld [vmem:[#allocation2 + $0x50] sm:$0xff]
    %v119 = vld [vmem:[#allocation2 + $0x58] sm:$0xff]
    %v120 = vld [vmem:[#allocation2 + $0x60] sm:$0xff]
    %v121 = vld [vmem:[#allocation2 + $0x68] sm:$0xff]
    %v122 = vld [vmem:[#allocation2 + $0x70] sm:$0xff]
    %v123 = vld [vmem:[#allocation2 + $0x78] sm:$0xff]
    %v124 = vld [vmem:[#allocation3] sm:$0xf]
    %v125 = vld [vmem:[#allocation3 + $0x4] sm:$0xf]
    %v126 = vld [vmem:[#allocation3 + $0x8] sm:$0xf]
    %v127 = vld [vmem:[#allocation3 + $0xc] sm:$0xf]
    %v128 = vld [vmem:[#allocation3 + $0x10] sm:$0xf]
    %v129 = vld [vmem:[#allocation3 + $0x14] sm:$0xf]
    %v130 = vld [vmem:[#allocation3 + $0x18] sm:$0xf]
    %v131 = vld [vmem:[#allocation3 + $0x1c] sm:$0xf]
    %v132 = vld [vmem:[#allocation3 + $0x20] sm:$0xf]
    %v133 = vld [vmem:[#allocation3 + $0x24] sm:$0xf]
    %v134 = vld [vmem:[#allocation3 + $0x28] sm:$0xf]
    %v135 = vld [vmem:[#allocation3 + $0x2c] sm:$0xf]
    %v136 = vld [vmem:[#allocation3 + $0x30] sm:$0xf]
    %v137 = vld [vmem:[#allocation3 + $0x34] sm:$0xf]
    %v138 = vld [vmem:[#allocation3 + $0x38] sm:$0xf]
    %v139 = vld [vmem:[#allocation3 + $0x3c] sm:$0xf]
    %v156 = vunpack.c.l.b16 %v124
    %v157 = vunpack.c.l.b16 %v125
    %v158 = vunpack.c.l.b16 %v126
    %v159 = vunpack.c.l.b16 %v127
    %v160 = vunpack.c.l.b16 %v128
    %v161 = vunpack.c.l.b16 %v129
    %v162 = vunpack.c.l.b16 %v130
    %v163 = vunpack.c.l.b16 %v131
    %v164 = vunpack.c.l.b16 %v132
    %v165 = vunpack.c.l.b16 %v133
    %v166 = vunpack.c.l.b16 %v134
    %v167 = vunpack.c.l.b16 %v135
    %v168 = vunpack.c.l.b16 %v136
    %v169 = vunpack.c.l.b16 %v137
    %v170 = vunpack.c.l.b16 %v138
    %v171 = vunpack.c.l.b16 %v139
    %v172 = vpack.c.b16 %v157, %v156
    %v173 = vpack.c.b16 %v159, %v158
    %v174 = vpack.c.b16 %v161, %v160
    %v175 = vpack.c.b16 %v163, %v162
    %v176 = vpack.c.b16 %v165, %v164
    %v177 = vpack.c.b16 %v167, %v166
    %v178 = vpack.c.b16 %v169, %v168
    %v179 = vpack.c.b16 %v171, %v170
    %v204 = vunpack.c.l.b16 %v92
    %v205 = vunpack.c.l.b16 %v93
    %v206 = vunpack.c.l.b16 %v94
    %v207 = vunpack.c.l.b16 %v95
    %v208 = vunpack.c.l.b16 %v96
    %v209 = vunpack.c.l.b16 %v97
    %v210 = vunpack.c.l.b16 %v98
    %v211 = vunpack.c.l.b16 %v99
    %v212 = vunpack.c.l.b16 %v100
    %v213 = vunpack.c.l.b16 %v101
    %v214 = vunpack.c.l.b16 %v102
    %v215 = vunpack.c.l.b16 %v103
    %v216 = vunpack.c.l.b16 %v104
    %v217 = vunpack.c.l.b16 %v105
    %v218 = vunpack.c.l.b16 %v106
    %v219 = vunpack.c.l.b16 %v107
    %v220 = vpack.c.b16 %v205, %v204
    %v221 = vpack.c.b16 %v207, %v206
    %v222 = vpack.c.b16 %v209, %v208
    %v223 = vpack.c.b16 %v211, %v210
    %v224 = vpack.c.b16 %v213, %v212
    %v225 = vpack.c.b16 %v215, %v214
    %v226 = vpack.c.b16 %v217, %v216
    %v227 = vpack.c.b16 %v219, %v218
    %236 = vmatprep.subr.bf16.mxu0 0
    %237 = vmatpush1.bf16.msra.mxu0 %v220
    %238 = vmatprep.subr.bf16.mxu0 0
    %239 = vmatpush1.bf16.msra.mxu0 %v221
    %240 = vmatprep.subr.bf16.mxu0 0
    %241 = vmatpush1.bf16.msra.mxu0 %v222
    %242 = vmatprep.subr.bf16.mxu0 0
    %243 = vmatpush1.bf16.msra.mxu0 %v223
    %244 = vmatprep.subr.bf16.mxu0 0
    %245 = vmatpush1.bf16.msra.mxu0 %v224
    %246 = vmatprep.subr.bf16.mxu0 0
    %247 = vmatpush1.bf16.msra.mxu0 %v225
    %248 = vmatprep.subr.bf16.mxu0 0
    %249 = vmatpush1.bf16.msra.mxu0 %v226
    %250 = vmatprep.subr.bf16.mxu0 0
    %251 = vmatpush1.bf16.msra.mxu0 %v227
    %252 = vmatprep.subr.bf16.mxu0 0
    %253 = vmatpush1.bf16.msra.mxu0 0
    %254 = vmatprep.subr.bf16.mxu0 0
    %255 = vmatpush1.bf16.msra.mxu0 0
    %256 = vmatprep.subr.bf16.mxu0 0
    %257 = vmatpush1.bf16.msra.mxu0 0
    %258 = vmatprep.subr.bf16.mxu0 0
    %259 = vmatpush1.bf16.msra.mxu0 0
    %260 = vmatprep.subr.bf16.mxu0 0
    %261 = vmatpush1.bf16.msra.mxu0 0
    %262 = vmatprep.subr.bf16.mxu0 0
    %263 = vmatpush1.bf16.msra.mxu0 0
    %264 = vmatprep.subr.bf16.mxu0 0
    %265 = vmatpush1.bf16.msra.mxu0 0
    %266 = vmatprep.subr.bf16.mxu0 0
    %267 = vmatpush1.bf16.msra.mxu0 0
    %268 = vmatprep.mubr.bf16.mxu0 0
    %269 = vmatmul.mubr.bf16.gmra.mrb[0].mxu0 %v172
    %v270 = vpop.f32.mrb[0].mxu0
    %v271 = vadd.f32 0.0, %v270
    %v272 = vpop.f32.mrb[0].mxu0
    %v273 = vpop.f32.mrb[0].mxu0
    %v274 = vadd.f32 0.0, %v273
    %v275 = vpop.f32.mrb[0].mxu0
    %276 = vmatprep.mubr.bf16.mxu0 0
    %277 = vmatmul.mubr.bf16.gmra.mrb[0].mxu0 %v173
    %v278 = vpop.f32.mrb[0].mxu0
    %v279 = vadd.f32 0.0, %v278
    %v280 = vpop.f32.mrb[0].mxu0
    %v281 = vpop.f32.mrb[0].mxu0
    %v282 = vadd.f32 0.0, %v281
    %v283 = vpop.f32.mrb[0].mxu0
    %284 = vmatprep.mubr.bf16.mxu0 0
    %285 = vmatmul.mubr.bf16.gmra.mrb[0].mxu0 %v174
    %v286 = vpop.f32.mrb[0].mxu0
    %v287 = vadd.f32 0.0, %v286
    %v288 = vpop.f32.mrb[0].mxu0
    %v289 = vpop.f32.mrb[0].mxu0
    %v290 = vadd.f32 0.0, %v289
    %v291 = vpop.f32.mrb[0].mxu0
    %292 = vmatprep.mubr.bf16.mxu0 0
    %293 = vmatmul.mubr.bf16.gmra.mrb[0].mxu0 %v175
    %v294 = vpop.f32.mrb[0].mxu0
    %v295 = vadd.f32 0.0, %v294
    %v296 = vpop.f32.mrb[0].mxu0
    %v297 = vpop.f32.mrb[0].mxu0
    %v298 = vadd.f32 0.0, %v297
    %v299 = vpop.f32.mrb[0].mxu0
    %300 = vmatprep.mubr.bf16.mxu0 0
    %301 = vmatmul.mubr.bf16.gmra.mrb[0].mxu0 %v176
    %v302 = vpop.f32.mrb[0].mxu0
    %v303 = vadd.f32 0.0, %v302
    %v304 = vpop.f32.mrb[0].mxu0
    %v305 = vpop.f32.mrb[0].mxu0
    %v306 = vadd.f32 0.0, %v305
    %v307 = vpop.f32.mrb[0].mxu0
    %308 = vmatprep.mubr.bf16.mxu0 0
    %309 = vmatmul.mubr.bf16.gmra.mrb[0].mxu0 %v177
    %v310 = vpop.f32.mrb[0].mxu0
    %v311 = vadd.f32 0.0, %v310
    %v312 = vpop.f32.mrb[0].mxu0
    %v313 = vpop.f32.mrb[0].mxu0
    %v314 = vadd.f32 0.0, %v313
    %v315 = vpop.f32.mrb[0].mxu0
    %316 = vmatprep.mubr.bf16.mxu0 0
    %317 = vmatmul.mubr.bf16.gmra.mrb[0].mxu0 %v178
    %v318 = vpop.f32.mrb[0].mxu0
    %v319 = vadd.f32 0.0, %v318
    %v320 = vpop.f32.mrb[0].mxu0
    %v321 = vpop.f32.mrb[0].mxu0
    %v322 = vadd.f32 0.0, %v321
    %v323 = vpop.f32.mrb[0].mxu0
    %324 = vmatprep.mubr.bf16.mxu0 0
    %325 = vmatmul.mubr.bf16.gmra.mrb[0].mxu0 %v179
    %v326 = vpop.f32.mrb[0].mxu0
    %v327 = vadd.f32 0.0, %v326
    %v328 = vpop.f32.mrb[0].mxu0
    %v329 = vpop.f32.mrb[0].mxu0
    %v330 = vadd.f32 0.0, %v329
    %v331 = vpop.f32.mrb[0].mxu0
    %332 = vdwg.mxu0
    %v333 = vadd.f32 %v108, %v271
    %v334 = vadd.f32 %v109, %v274
    %v335 = vadd.f32 %v110, %v279
    %v336 = vadd.f32 %v111, %v282
    %v337 = vadd.f32 %v112, %v287
    %v338 = vadd.f32 %v113, %v290
    %v339 = vadd.f32 %v114, %v295
    %v340 = vadd.f32 %v115, %v298
    %v341 = vadd.f32 %v116, %v303
    %v342 = vadd.f32 %v117, %v306
    %v343 = vadd.f32 %v118, %v311
    %v344 = vadd.f32 %v119, %v314
    %v345 = vadd.f32 %v120, %v319
    %v346 = vadd.f32 %v121, %v322
    %v347 = vadd.f32 %v122, %v327
    %v348 = vadd.f32 %v123, %v330
    %349 = vst [vmem:[#allocation2] sm:$0xff] %v333
    %350 = vst [vmem:[#allocation2 + $0x8] sm:$0xff] %v334
    %351 = vst [vmem:[#allocation2 + $0x10] sm:$0xff] %v335
    %352 = vst [vmem:[#allocation2 + $0x18] sm:$0xff] %v336
    %353 = vst [vmem:[#allocation2 + $0x20] sm:$0xff] %v337
    %354 = vst [vmem:[#allocation2 + $0x28] sm:$0xff] %v338
    %355 = vst [vmem:[#allocation2 + $0x30] sm:$0xff] %v339
    %356 = vst [vmem:[#allocation2 + $0x38] sm:$0xff] %v340
    %357 = vst [vmem:[#allocation2 + $0x40] sm:$0xff] %v341
    %358 = vst [vmem:[#allocation2 + $0x48] sm:$0xff] %v342
    %359 = vst [vmem:[#allocation2 + $0x50] sm:$0xff] %v343
    %360 = vst [vmem:[#allocation2 + $0x58] sm:$0xff] %v344
    %361 = vst [vmem:[#allocation2 + $0x60] sm:$0xff] %v345
    %362 = vst [vmem:[#allocation2 + $0x68] sm:$0xff] %v346
    %363 = vst [vmem:[#allocation2 + $0x70] sm:$0xff] %v347
    %364 = vst [vmem:[#allocation2 + $0x78] sm:$0xff] %v348
    // Predicated region
    $region38: #{fwd.3} parent=1 // pred_check
      %p365 = pneg %p72
    $region39: #{fwd.3} parent=1 // pred_check_branch
      %367 = sbr.rel (%p365) target = $region41
    $region40: #{fwd.3} parent=1 // pred_region
      %v368 = vld [vmem:[#allocation2] sm:$0xff]
      %v369 = vld [vmem:[#allocation2 + $0x8] sm:$0xff]
      %v370 = vld [vmem:[#allocation2 + $0x10] sm:$0xff]
      %v371 = vld [vmem:[#allocation2 + $0x18] sm:$0xff]
      %v372 = vld [vmem:[#allocation2 + $0x20] sm:$0xff]
      %v373 = vld [vmem:[#allocation2 + $0x28] sm:$0xff]
      %v374 = vld [vmem:[#allocation2 + $0x30] sm:$0xff]
      %v375 = vld [vmem:[#allocation2 + $0x38] sm:$0xff]
      %v376 = vld [vmem:[#allocation2 + $0x40] sm:$0xff]
      %v377 = vld [vmem:[#allocation2 + $0x48] sm:$0xff]
      %v378 = vld [vmem:[#allocation2 + $0x50] sm:$0xff]
      %v379 = vld [vmem:[#allocation2 + $0x58] sm:$0xff]
      %v380 = vld [vmem:[#allocation2 + $0x60] sm:$0xff]
      %v381 = vld [vmem:[#allocation2 + $0x68] sm:$0xff]
      %v382 = vld [vmem:[#allocation2 + $0x70] sm:$0xff]
      %v383 = vld [vmem:[#allocation2 + $0x78] sm:$0xff]
      %v384 = vpack.c.bf16 %v369, %v368
      %v385 = vpack.c.bf16 %v371, %v370
      %v386 = vpack.c.bf16 %v373, %v372
      %v387 = vpack.c.bf16 %v375, %v374
      %v388 = vpack.c.bf16 %v377, %v376
      %v389 = vpack.c.bf16 %v379, %v378
      %v390 = vpack.c.bf16 %v381, %v380
      %v391 = vpack.c.bf16 %v383, %v382
      %v392 = vld [vmem:[#allocation8] sm:$0xf]
      %v393 = vld [vmem:[#allocation8 + $0x4] sm:$0xf]
      %v394 = vld [vmem:[#allocation8 + $0x8] sm:$0xf]
      %v395 = vld [vmem:[#allocation8 + $0xc] sm:$0xf]
      %v396 = vld [vmem:[#allocation8 + $0x10] sm:$0xf]
      %v397 = vld [vmem:[#allocation8 + $0x14] sm:$0xf]
      %v398 = vld [vmem:[#allocation8 + $0x18] sm:$0xf]
      %v399 = vld [vmem:[#allocation8 + $0x1c] sm:$0xf]
      %v400 = vld [vmem:[#allocation8 + $0x20] sm:$0xf]
      %v401 = vld [vmem:[#allocation8 + $0x24] sm:$0xf]
      %v402 = vld [vmem:[#allocation8 + $0x28] sm:$0xf]
      %v403 = vld [vmem:[#allocation8 + $0x2c] sm:$0xf]
      %v404 = vld [vmem:[#allocation8 + $0x30] sm:$0xf]
      %v405 = vld [vmem:[#allocation8 + $0x34] sm:$0xf]
      %v406 = vld [vmem:[#allocation8 + $0x38] sm:$0xf]
      %v407 = vld [vmem:[#allocation8 + $0x3c] sm:$0xf]
      %v408 = vld [vmem:[#allocation9] sm:$0x1]
      %v410 = vlaneseq
      %v411 = vshrl.u32 %v410, 7
      %v412 = vsub.s32 0, %v411
      %v413 = vrot.slane %v408, %v412
      %v431 = vunpack.c.l.b16 %v392
      %v432 = vunpack.c.l.b16 %v393
      %v433 = vunpack.c.l.b16 %v394
      %v434 = vunpack.c.l.b16 %v395
      %v435 = vunpack.c.l.b16 %v396
      %v436 = vunpack.c.l.b16 %v397
      %v437 = vunpack.c.l.b16 %v398
      %v438 = vunpack.c.l.b16 %v399
      %v439 = vunpack.c.l.b16 %v400
      %v440 = vunpack.c.l.b16 %v401
      %v441 = vunpack.c.l.b16 %v402
      %v442 = vunpack.c.l.b16 %v403
      %v443 = vunpack.c.l.b16 %v404
      %v444 = vunpack.c.l.b16 %v405
      %v445 = vunpack.c.l.b16 %v406
      %v446 = vunpack.c.l.b16 %v407
      %v447 = vpack.c.b16 %v432, %v431
      %v448 = vpack.c.b16 %v434, %v433
      %v449 = vpack.c.b16 %v436, %v435
      %v450 = vpack.c.b16 %v438, %v437
      %v451 = vpack.c.b16 %v440, %v439
      %v452 = vpack.c.b16 %v442, %v441
      %v453 = vpack.c.b16 %v444, %v443
      %v454 = vpack.c.b16 %v446, %v445
      %463 = vmatprep.subr.bf16.mxu0 0
      %464 = vmatpush1.bf16.msra.mxu0 %v447
      %465 = vmatprep.subr.bf16.mxu0 0
      %466 = vmatpush1.bf16.msra.mxu0 %v448
      %467 = vmatprep.subr.bf16.mxu0 0
      %468 = vmatpush1.bf16.msra.mxu0 %v449
      %469 = vmatprep.subr.bf16.mxu0 0
      %470 = vmatpush1.bf16.msra.mxu0 %v450
      %471 = vmatprep.subr.bf16.mxu0 0
      %472 = vmatpush1.bf16.msra.mxu0 %v451
      %473 = vmatprep.subr.bf16.mxu0 0
      %474 = vmatpush1.bf16.msra.mxu0 %v452
      %475 = vmatprep.subr.bf16.mxu0 0
      %476 = vmatpush1.bf16.msra.mxu0 %v453
      %477 = vmatprep.subr.bf16.mxu0 0
      %478 = vmatpush1.bf16.msra.mxu0 %v454
      %479 = vmatprep.subr.bf16.mxu0 0
      %480 = vmatpush1.bf16.msra.mxu0 0
      %481 = vmatprep.subr.bf16.mxu0 0
      %482 = vmatpush1.bf16.msra.mxu0 0
      %483 = vmatprep.subr.bf16.mxu0 0
      %484 = vmatpush1.bf16.msra.mxu0 0
      %485 = vmatprep.subr.bf16.mxu0 0
      %486 = vmatpush1.bf16.msra.mxu0 0
      %487 = vmatprep.subr.bf16.mxu0 0
      %488 = vmatpush1.bf16.msra.mxu0 0
      %489 = vmatprep.subr.bf16.mxu0 0
      %490 = vmatpush1.bf16.msra.mxu0 0
      %491 = vmatprep.subr.bf16.mxu0 0
      %492 = vmatpush1.bf16.msra.mxu0 0
      %493 = vmatprep.subr.bf16.mxu0 0
      %494 = vmatpush1.bf16.msra.mxu0 0
      %495 = vmatprep.mubr.bf16.mxu0 0
      %496 = vmatmul.mubr.bf16.gmra.mrb[0].mxu0 %v384
      %v497 = vpop.f32.mrb[0].mxu0
      %v498 = vadd.f32 %v413, %v497
      %v499 = vpop.f32.mrb[0].mxu0
      %v500 = vpop.f32.mrb[0].mxu0
      %v501 = vadd.f32 %v413, %v500
      %v502 = vpop.f32.mrb[0].mxu0
      %503 = vmatprep.mubr.bf16.mxu0 0
      %504 = vmatmul.mubr.bf16.gmra.mrb[0].mxu0 %v385
      %v505 = vpop.f32.mrb[0].mxu0
      %v506 = vadd.f32 %v413, %v505
      %v507 = vpop.f32.mrb[0].mxu0
      %v508 = vpop.f32.mrb[0].mxu0
      %v509 = vadd.f32 %v413, %v508
      %v510 = vpop.f32.mrb[0].mxu0
      %511 = vmatprep.mubr.bf16.mxu0 0
      %512 = vmatmul.mubr.bf16.gmra.mrb[0].mxu0 %v386
      %v513 = vpop.f32.mrb[0].mxu0
      %v514 = vadd.f32 %v413, %v513
      %v515 = vpop.f32.mrb[0].mxu0
      %v516 = vpop.f32.mrb[0].mxu0
      %v517 = vadd.f32 %v413, %v516
      %v518 = vpop.f32.mrb[0].mxu0
      %519 = vmatprep.mubr.bf16.mxu0 0
      %520 = vmatmul.mubr.bf16.gmra.mrb[0].mxu0 %v387
      %v521 = vpop.f32.mrb[0].mxu0
      %v522 = vadd.f32 %v413, %v521
      %v523 = vpop.f32.mrb[0].mxu0
      %v524 = vpop.f32.mrb[0].mxu0
      %v525 = vadd.f32 %v413, %v524
      %v526 = vpop.f32.mrb[0].mxu0
      %527 = vmatprep.mubr.bf16.mxu0 0
      %528 = vmatmul.mubr.bf16.gmra.mrb[0].mxu0 %v388
      %v529 = vpop.f32.mrb[0].mxu0
      %v530 = vadd.f32 %v413, %v529
      %v531 = vpop.f32.mrb[0].mxu0
      %v532 = vpop.f32.mrb[0].mxu0
      %v533 = vadd.f32 %v413, %v532
      %v534 = vpop.f32.mrb[0].mxu0
      %535 = vmatprep.mubr.bf16.mxu0 0
      %536 = vmatmul.mubr.bf16.gmra.mrb[0].mxu0 %v389
      %v537 = vpop.f32.mrb[0].mxu0
      %v538 = vadd.f32 %v413, %v537
      %v539 = vpop.f32.mrb[0].mxu0
      %v540 = vpop.f32.mrb[0].mxu0
      %v541 = vadd.f32 %v413, %v540
      %v542 = vpop.f32.mrb[0].mxu0
      %543 = vmatprep.mubr.bf16.mxu0 0
      %544 = vmatmul.mubr.bf16.gmra.mrb[0].mxu0 %v390
      %v545 = vpop.f32.mrb[0].mxu0
      %v546 = vadd.f32 %v413, %v545
      %v547 = vpop.f32.mrb[0].mxu0
      %v548 = vpop.f32.mrb[0].mxu0
      %v549 = vadd.f32 %v413, %v548
      %v550 = vpop.f32.mrb[0].mxu0
      %551 = vmatprep.mubr.bf16.mxu0 0
      %552 = vmatmul.mubr.bf16.gmra.mrb[0].mxu0 %v391
      %v553 = vpop.f32.mrb[0].mxu0
      %v554 = vadd.f32 %v413, %v553
      %v555 = vpop.f32.mrb[0].mxu0
      %v556 = vpop.f32.mrb[0].mxu0
      %v557 = vadd.f32 %v413, %v556
      %v558 = vpop.f32.mrb[0].mxu0
      %559 = vdwg.mxu0
      %560 = vst [vmem:[#allocation11] sm:$0xff] %v498
      %561 = vst [vmem:[#allocation11 + $0x8] sm:$0xff] %v501
      %562 = vst [vmem:[#allocation11 + $0x10] sm:$0xff] %v506
      %563 = vst [vmem:[#allocation11 + $0x18] sm:$0xff] %v509
      %564 = vst [vmem:[#allocation11 + $0x20] sm:$0xff] %v514
      %565 = vst [vmem:[#allocation11 + $0x28] sm:$0xff] %v517
      %566 = vst [vmem:[#allocation11 + $0x30] sm:$0xff] %v522
      %567 = vst [vmem:[#allocation11 + $0x38] sm:$0xff] %v525
      %568 = vst [vmem:[#allocation11 + $0x40] sm:$0xff] %v530
      %569 = vst [vmem:[#allocation11 + $0x48] sm:$0xff] %v533
      %570 = vst [vmem:[#allocation11 + $0x50] sm:$0xff] %v538
      %571 = vst [vmem:[#allocation11 + $0x58] sm:$0xff] %v541
      %572 = vst [vmem:[#allocation11 + $0x60] sm:$0xff] %v546
      %573 = vst [vmem:[#allocation11 + $0x68] sm:$0xff] %v549
      %574 = vst [vmem:[#allocation11 + $0x70] sm:$0xff] %v554
      %575 = vst [vmem:[#allocation11 + $0x78] sm:$0xff] %v557
    $region41: #{fwd.3} parent=1 // pred_fallthru
      _
    // Predicated region
    $region42: #{fwd.3} parent=1 // pred_check
      _
    $region43: #{fwd.3} parent=1 // pred_check_branch
      %577 = sbr.rel (0) target = $region45
    $region44: #{fwd.3} parent=1 // pred_region
      %s579 = ssub.s32 2048, 2048
      %580 = vsyncadd [#allocation5], %s579
      %s581 = sshll.u32 [#allocation11], 4
      %s582 = int_to_ptr.vmem [resolvable:$true] %s581
      %587 = dma.vmem_to_hbm [thread:$0]  %s582, 2048, %s4, [#allocation5], 128, 128, 8
    $region45: #{fwd.3} parent=1 // pred_fallthru
      _
    // Predicated region
    $region46: #{fwd.3} parent=1 // pred_check
      _
    $region47: #{fwd.3} parent=1 // pred_check_branch
      %589 = sbr.rel (0) target = $region49
    $region48: #{fwd.3} parent=1 // pred_region
      %590 = dma.done [#allocation5], 2048
    $region49: #{fwd.3} parent=1 // pred_fallthru
      _
    %591 = vsyncpa [#allocation4], 1
    %592 = vsyncpa [#allocation7], 1
    %593 = vsyncpa [#allocation10], 1
    %594 = vsyncpa [#allocation5], 1

// kernel: fwd.2
$region0: #{fwd.2}
  #allocation0 [shape = 'u32[]', space=smem, size = 0x4, offset = 0x4, fixed_abs, tag = 'smem constant byte address 0x4 - core index']
  #allocation1 [shape = 'u32[144,128]{1,0:T(1,128)}', space=vmem, size = 0x12000, scoped, tag = 'internal scratch']
  #allocation2 [shape = 'f32[128,128]{1,0:T(8,128)}', space=vmem, size = 0x10000, scoped, tag = 'scratch operand']
  %s0 = inlined_call_operand.hbm [shape: bf16[128,128], index: 0, kind: input, shape index: {}]
  %s1 = inlined_call_operand.hbm [shape: bf16[128,128], index: 1, kind: input, shape index: {}]
  %s2 = inlined_call_operand.hbm [shape: bf16[128,128], index: 2, kind: input, shape index: {}]
  %s3 = inlined_call_operand.hbm [shape: f32[1,128], index: 3, kind: input, shape index: {}]
  %s4 = inlined_call_operand.hbm [shape: bf16[128,128], index: 4, kind: output, shape index: {}]
  %s5 = sld [smem:[#allocation0]]
  $region50: #{fwd.2} parent=0
    _
  %s7 = ssub.s32 1, %s5
  %s8 = scalar_select 0, %s7, %s5
  $region1: #{fwd.2} parent=0
    #allocation3 [shape = 'u8[32768]{0}', space=vmem, size = 0x8000, scoped, tag = 'input window, operand 0, single buffered']
    #allocation4 [shape = 's32[1]{0}', space=sflag, size = 0x4, scoped, tag = 'scoped memory for fwd.2']
    #allocation5 [shape = 's32[1]{0}', space=sflag, size = 0x4, scoped, tag = 'scoped memory for fwd.2']
    #allocation6 [shape = 'u8[32768]{0}', space=vmem, size = 0x8000, scoped, tag = 'input window, operand 1, single buffered']
    #allocation7 [shape = 's32[1]{0}', space=sflag, size = 0x4, scoped, tag = 'scoped memory for fwd.2']
    #allocation8 [shape = 'u8[32768]{0}', space=vmem, size = 0x8000, scoped, tag = 'input window, operand 2, single buffered']
    #allocation9 [shape = 'u8[512]{0}', space=vmem, size = 0x400, scoped, tag = 'input window, operand 3, single buffered']
    #allocation10 [shape = 's32[1]{0}', space=sflag, size = 0x4, scoped, tag = 'scoped memory for fwd.2']
    #allocation11 [shape = 'u8[32768]{0}', space=vmem, size = 0x8000, scoped, tag = 'output window, operand 0, single buffered']
    %9 = vsyncpa [#allocation4], 0
    %10 = vsyncpa [#allocation7], 0
    %11 = vsyncpa [#allocation10], 0
    %12 = vsyncpa [#allocation5], 0
    // Predicated region
    $region2: #{fwd.2} parent=1 // pred_check
      _
    $region3: #{fwd.2} parent=1 // pred_check_branch
      %14 = sbr.rel (0) target = $region5
    $region4: #{fwd.2} parent=1 // pred_region
      %s16 = ssub.s32 1024, 1024
      %17 = vsyncadd [#allocation4], %s16
      %s18 = sshll.u32 [#allocation3], 4
      %s19 = int_to_ptr.vmem [resolvable:$true] %s18
      %24 = dma.hbm_to_vmem [thread:$0]  %s0, 1024, %s19, [#allocation4], 64, 64, 4
    $region5: #{fwd.2} parent=1 // pred_fallthru
      _
    // Predicated region
    $region6: #{fwd.2} parent=1 // pred_check
      _
    $region7: #{fwd.2} parent=1 // pred_check_branch
      %26 = sbr.rel (0) target = $region9
    $region8: #{fwd.2} parent=1 // pred_region
      %s28 = ssub.s32 1024, 1024
      %29 = vsyncadd [#allocation7], %s28
      %s30 = sshll.u32 [#allocation6], 4
      %s31 = int_to_ptr.vmem [resolvable:$true] %s30
      %36 = dma.hbm_to_vmem [thread:$0]  %s1, 1024, %s31, [#allocation7], 64, 64, 4
    $region9: #{fwd.2} parent=1 // pred_fallthru
      _
    // Predicated region
    $region10: #{fwd.2} parent=1 // pred_check
      _
    $region11: #{fwd.2} parent=1 // pred_check_branch
      %38 = sbr.rel (0) target = $region13
    $region12: #{fwd.2} parent=1 // pred_region
      %s40 = ssub.s32 1024, 1024
      %41 = vsyncadd [#allocation7], %s40
      %s42 = sshll.u32 [#allocation8], 4
      %s43 = int_to_ptr.vmem [resolvable:$true] %s42
      %48 = dma.hbm_to_vmem [thread:$0]  %s2, 1024, %s43, [#allocation7], 64, 64, 4
    $region13: #{fwd.2} parent=1 // pred_fallthru
      _
    // Predicated region
    $region14: #{fwd.2} parent=1 // pred_check
      _
    $region15: #{fwd.2} parent=1 // pred_check_branch
      %50 = sbr.rel (0) target = $region17
    $region16: #{fwd.2} parent=1 // pred_region
      %s52 = ssub.s32 16, 16
      %53 = vsyncadd [#allocation10], %s52
      %s55 = sshll.u32 [#allocation9], 4
      %s56 = int_to_ptr.vmem [resolvable:$true] %s55
      %58 = dma.hbm_to_vmem [thread:$0]  %s3, 16, %s56, [#allocation10]
    $region17: #{fwd.2} parent=1 // pred_fallthru
      _
    // Predicated region
    $region18: #{fwd.2} parent=1 // pred_check
      _
    $region19: #{fwd.2} parent=1 // pred_check_branch
      %60 = sbr.rel (0) target = $region21
    $region20: #{fwd.2} parent=1 // pred_region
      %61 = dma.done [#allocation4], 1024
    $region21: #{fwd.2} parent=1 // pred_fallthru
      _
    // Predicated region
    $region22: #{fwd.2} parent=1 // pred_check
      _
    $region23: #{fwd.2} parent=1 // pred_check_branch
      %63 = sbr.rel (0) target = $region25
    $region24: #{fwd.2} parent=1 // pred_region
      %64 = dma.done [#allocation7], 1024
    $region25: #{fwd.2} parent=1 // pred_fallthru
      _
    // Predicated region
    $region26: #{fwd.2} parent=1 // pred_check
      _
    $region27: #{fwd.2} parent=1 // pred_check_branch
      %66 = sbr.rel (0) target = $region29
    $region28: #{fwd.2} parent=1 // pred_region
      %67 = dma.done [#allocation7], 1024
    $region29: #{fwd.2} parent=1 // pred_fallthru
      _
    // Predicated region
    $region30: #{fwd.2} parent=1 // pred_check
      _
    $region31: #{fwd.2} parent=1 // pred_check_branch
      %69 = sbr.rel (0) target = $region33
    $region32: #{fwd.2} parent=1 // pred_region
      %70 = dma.done [#allocation10], 16
    $region33: #{fwd.2} parent=1 // pred_fallthru
      _
    %p72 = scmp.eq.s32.totalorder 0, 0
    // Predicated region
    $region34: #{fwd.2} parent=1 // pred_check
      %p73 = pneg %p72
    $region35: #{fwd.2} parent=1 // pred_check_branch
      %75 = sbr.rel (%p73) target = $region37
    $region36: #{fwd.2} parent=1 // pred_region
      %76 = vst [vmem:[#allocation2] sm:$0xff] 0.0
      %77 = vst [vmem:[#allocation2 + $0x8] sm:$0xff] 0.0
      %78 = vst [vmem:[#allocation2 + $0x10] sm:$0xff] 0.0
      %79 = vst [vmem:[#allocation2 + $0x18] sm:$0xff] 0.0
      %80 = vst [vmem:[#allocation2 + $0x20] sm:$0xff] 0.0
      %81 = vst [vmem:[#allocation2 + $0x28] sm:$0xff] 0.0
      %82 = vst [vmem:[#allocation2 + $0x30] sm:$0xff] 0.0
      %83 = vst [vmem:[#allocation2 + $0x38] sm:$0xff] 0.0
      %84 = vst [vmem:[#allocation2 + $0x40] sm:$0xff] 0.0
      %85 = vst [vmem:[#allocation2 + $0x48] sm:$0xff] 0.0
      %86 = vst [vmem:[#allocation2 + $0x50] sm:$0xff] 0.0
      %87 = vst [vmem:[#allocation2 + $0x58] sm:$0xff] 0.0
      %88 = vst [vmem:[#allocation2 + $0x60] sm:$0xff] 0.0
      %89 = vst [vmem:[#allocation2 + $0x68] sm:$0xff] 0.0
      %90 = vst [vmem:[#allocation2 + $0x70] sm:$0xff] 0.0
      %91 = vst [vmem:[#allocation2 + $0x78] sm:$0xff] 0.0
    $region37: #{fwd.2} parent=1 // pred_fallthru
      _
    %v92 = vld [vmem:[#allocation6] sm:$0xf]
    %v93 = vld [vmem:[#allocation6 + $0x4] sm:$0xf]
    %v94 = vld [vmem:[#allocation6 + $0x8] sm:$0xf]
    %v95 = vld [vmem:[#allocation6 + $0xc] sm:$0xf]
    %v96 = vld [vmem:[#allocation6 + $0x10] sm:$0xf]
    %v97 = vld [vmem:[#allocation6 + $0x14] sm:$0xf]
    %v98 = vld [vmem:[#allocation6 + $0x18] sm:$0xf]
    %v99 = vld [vmem:[#allocation6 + $0x1c] sm:$0xf]
    %v100 = vld [vmem:[#allocation6 + $0x20] sm:$0xf]
    %v101 = vld [vmem:[#allocation6 + $0x24] sm:$0xf]
    %v102 = vld [vmem:[#allocation6 + $0x28] sm:$0xf]
    %v103 = vld [vmem:[#allocation6 + $0x2c] sm:$0xf]
    %v104 = vld [vmem:[#allocation6 + $0x30] sm:$0xf]
    %v105 = vld [vmem:[#allocation6 + $0x34] sm:$0xf]
    %v106 = vld [vmem:[#allocation6 + $0x38] sm:$0xf]
    %v107 = vld [vmem:[#allocation6 + $0x3c] sm:$0xf]
    %v108 = vld [vmem:[#allocation2] sm:$0xff]
    %v109 = vld [vmem:[#allocation2 + $0x8] sm:$0xff]
    %v110 = vld [vmem:[#allocation2 + $0x10] sm:$0xff]
    %v111 = vld [vmem:[#allocation2 + $0x18] sm:$0xff]
    %v112 = vld [vmem:[#allocation2 + $0x20] sm:$0xff]
    %v113 = vld [vmem:[#allocation2 + $0x28] sm:$0xff]
    %v114 = vld [vmem:[#allocation2 + $0x30] sm:$0xff]
    %v115 = vld [vmem:[#allocation2 + $0x38] sm:$0xff]
    %v116 = vld [vmem:[#allocation2 + $0x40] sm:$0xff]
    %v117 = vld [vmem:[#allocation2 + $0x48] sm:$0xff]
    %v118 = vld [vmem:[#allocation2 + $0x50] sm:$0xff]
    %v119 = vld [vmem:[#allocation2 + $0x58] sm:$0xff]
    %v120 = vld [vmem:[#allocation2 + $0x60] sm:$0xff]
    %v121 = vld [vmem:[#allocation2 + $0x68] sm:$0xff]
    %v122 = vld [vmem:[#allocation2 + $0x70] sm:$0xff]
    %v123 = vld [vmem:[#allocation2 + $0x78] sm:$0xff]
    %v124 = vld [vmem:[#allocation3] sm:$0xf]
    %v125 = vld [vmem:[#allocation3 + $0x4] sm:$0xf]
    %v126 = vld [vmem:[#allocation3 + $0x8] sm:$0xf]
    %v127 = vld [vmem:[#allocation3 + $0xc] sm:$0xf]
    %v128 = vld [vmem:[#allocation3 + $0x10] sm:$0xf]
    %v129 = vld [vmem:[#allocation3 + $0x14] sm:$0xf]
    %v130 = vld [vmem:[#allocation3 + $0x18] sm:$0xf]
    %v131 = vld [vmem:[#allocation3 + $0x1c] sm:$0xf]
    %v132 = vld [vmem:[#allocation3 + $0x20] sm:$0xf]
    %v133 = vld [vmem:[#allocation3 + $0x24] sm:$0xf]
    %v134 = vld [vmem:[#allocation3 + $0x28] sm:$0xf]
    %v135 = vld [vmem:[#allocation3 + $0x2c] sm:$0xf]
    %v136 = vld [vmem:[#allocation3 + $0x30] sm:$0xf]
    %v137 = vld [vmem:[#allocation3 + $0x34] sm:$0xf]
    %v138 = vld [vmem:[#allocation3 + $0x38] sm:$0xf]
    %v139 = vld [vmem:[#allocation3 + $0x3c] sm:$0xf]
    %v156 = vunpack.c.l.b16 %v124
    %v157 = vunpack.c.l.b16 %v125
    %v158 = vunpack.c.l.b16 %v126
    %v159 = vunpack.c.l.b16 %v127
    %v160 = vunpack.c.l.b16 %v128
    %v161 = vunpack.c.l.b16 %v129
    %v162 = vunpack.c.l.b16 %v130
    %v163 = vunpack.c.l.b16 %v131
    %v164 = vunpack.c.l.b16 %v132
    %v165 = vunpack.c.l.b16 %v133
    %v166 = vunpack.c.l.b16 %v134
    %v167 = vunpack.c.l.b16 %v135
    %v168 = vunpack.c.l.b16 %v136
    %v169 = vunpack.c.l.b16 %v137
    %v170 = vunpack.c.l.b16 %v138
    %v171 = vunpack.c.l.b16 %v139
    %v172 = vpack.c.b16 %v157, %v156
    %v173 = vpack.c.b16 %v159, %v158
    %v174 = vpack.c.b16 %v161, %v160
    %v175 = vpack.c.b16 %v163, %v162
    %v176 = vpack.c.b16 %v165, %v164
    %v177 = vpack.c.b16 %v167, %v166
    %v178 = vpack.c.b16 %v169, %v168
    %v179 = vpack.c.b16 %v171, %v170
    %v204 = vunpack.c.l.b16 %v92
    %v205 = vunpack.c.l.b16 %v93
    %v206 = vunpack.c.l.b16 %v94
    %v207 = vunpack.c.l.b16 %v95
    %v208 = vunpack.c.l.b16 %v96
    %v209 = vunpack.c.l.b16 %v97
    %v210 = vunpack.c.l.b16 %v98
    %v211 = vunpack.c.l.b16 %v99
    %v212 = vunpack.c.l.b16 %v100
    %v213 = vunpack.c.l.b16 %v101
    %v214 = vunpack.c.l.b16 %v102
    %v215 = vunpack.c.l.b16 %v103
    %v216 = vunpack.c.l.b16 %v104
    %v217 = vunpack.c.l.b16 %v105
    %v218 = vunpack.c.l.b16 %v106
    %v219 = vunpack.c.l.b16 %v107
    %v220 = vpack.c.b16 %v205, %v204
    %v221 = vpack.c.b16 %v207, %v206
    %v222 = vpack.c.b16 %v209, %v208
    %v223 = vpack.c.b16 %v211, %v210
    %v224 = vpack.c.b16 %v213, %v212
    %v225 = vpack.c.b16 %v215, %v214
    %v226 = vpack.c.b16 %v217, %v216
    %v227 = vpack.c.b16 %v219, %v218
    %236 = vmatprep.subr.bf16.mxu0 0
    %237 = vmatpush1.bf16.msra.mxu0 %v220
    %238 = vmatprep.subr.bf16.mxu0 0
    %239 = vmatpush1.bf16.msra.mxu0 %v221
    %240 = vmatprep.subr.bf16.mxu0 0
    %241 = vmatpush1.bf16.msra.mxu0 %v222
    %242 = vmatprep.subr.bf16.mxu0 0
    %243 = vmatpush1.bf16.msra.mxu0 %v223
    %244 = vmatprep.subr.bf16.mxu0 0
    %245 = vmatpush1.bf16.msra.mxu0 %v224
    %246 = vmatprep.subr.bf16.mxu0 0
    %247 = vmatpush1.bf16.msra.mxu0 %v225
    %248 = vmatprep.subr.bf16.mxu0 0
    %249 = vmatpush1.bf16.msra.mxu0 %v226
    %250 = vmatprep.subr.bf16.mxu0 0
    %251 = vmatpush1.bf16.msra.mxu0 %v227
    %252 = vmatprep.subr.bf16.mxu0 0
    %253 = vmatpush1.bf16.msra.mxu0 0
    %254 = vmatprep.subr.bf16.mxu0 0
    %255 = vmatpush1.bf16.msra.mxu0 0
    %256 = vmatprep.subr.bf16.mxu0 0
    %257 = vmatpush1.bf16.msra.mxu0 0
    %258 = vmatprep.subr.bf16.mxu0 0
    %259 = vmatpush1.bf16.msra.mxu0 0
    %260 = vmatprep.subr.bf16.mxu0 0
    %261 = vmatpush1.bf16.msra.mxu0 0
    %262 = vmatprep.subr.bf16.mxu0 0
    %263 = vmatpush1.bf16.msra.mxu0 0
    %264 = vmatprep.subr.bf16.mxu0 0
    %265 = vmatpush1.bf16.msra.mxu0 0
    %266 = vmatprep.subr.bf16.mxu0 0
    %267 = vmatpush1.bf16.msra.mxu0 0
    %268 = vmatprep.mubr.bf16.mxu0 0
    %269 = vmatmul.mubr.bf16.gmra.mrb[0].mxu0 %v172
    %v270 = vpop.f32.mrb[0].mxu0
    %v271 = vadd.f32 0.0, %v270
    %v272 = vpop.f32.mrb[0].mxu0
    %v273 = vpop.f32.mrb[0].mxu0
    %v274 = vadd.f32 0.0, %v273
    %v275 = vpop.f32.mrb[0].mxu0
    %276 = vmatprep.mubr.bf16.mxu0 0
    %277 = vmatmul.mubr.bf16.gmra.mrb[0].mxu0 %v173
    %v278 = vpop.f32.mrb[0].mxu0
    %v279 = vadd.f32 0.0, %v278
    %v280 = vpop.f32.mrb[0].mxu0
    %v281 = vpop.f32.mrb[0].mxu0
    %v282 = vadd.f32 0.0, %v281
    %v283 = vpop.f32.mrb[0].mxu0
    %284 = vmatprep.mubr.bf16.mxu0 0
    %285 = vmatmul.mubr.bf16.gmra.mrb[0].mxu0 %v174
    %v286 = vpop.f32.mrb[0].mxu0
    %v287 = vadd.f32 0.0, %v286
    %v288 = vpop.f32.mrb[0].mxu0
    %v289 = vpop.f32.mrb[0].mxu0
    %v290 = vadd.f32 0.0, %v289
    %v291 = vpop.f32.mrb[0].mxu0
    %292 = vmatprep.mubr.bf16.mxu0 0
    %293 = vmatmul.mubr.bf16.gmra.mrb[0].mxu0 %v175
    %v294 = vpop.f32.mrb[0].mxu0
    %v295 = vadd.f32 0.0, %v294
    %v296 = vpop.f32.mrb[0].mxu0
    %v297 = vpop.f32.mrb[0].mxu0
    %v298 = vadd.f32 0.0, %v297
    %v299 = vpop.f32.mrb[0].mxu0
    %300 = vmatprep.mubr.bf16.mxu0 0
    %301 = vmatmul.mubr.bf16.gmra.mrb[0].mxu0 %v176
    %v302 = vpop.f32.mrb[0].mxu0
    %v303 = vadd.f32 0.0, %v302
    %v304 = vpop.f32.mrb[0].mxu0
    %v305 = vpop.f32.mrb[0].mxu0
    %v306 = vadd.f32 0.0, %v305
    %v307 = vpop.f32.mrb[0].mxu0
    %308 = vmatprep.mubr.bf16.mxu0 0
    %309 = vmatmul.mubr.bf16.gmra.mrb[0].mxu0 %v177
    %v310 = vpop.f32.mrb[0].mxu0
    %v311 = vadd.f32 0.0, %v310
    %v312 = vpop.f32.mrb[0].mxu0
    %v313 = vpop.f32.mrb[0].mxu0
    %v314 = vadd.f32 0.0, %v313
    %v315 = vpop.f32.mrb[0].mxu0
    %316 = vmatprep.mubr.bf16.mxu0 0
    %317 = vmatmul.mubr.bf16.gmra.mrb[0].mxu0 %v178
    %v318 = vpop.f32.mrb[0].mxu0
    %v319 = vadd.f32 0.0, %v318
    %v320 = vpop.f32.mrb[0].mxu0
    %v321 = vpop.f32.mrb[0].mxu0
    %v322 = vadd.f32 0.0, %v321
    %v323 = vpop.f32.mrb[0].mxu0
    %324 = vmatprep.mubr.bf16.mxu0 0
    %325 = vmatmul.mubr.bf16.gmra.mrb[0].mxu0 %v179
    %v326 = vpop.f32.mrb[0].mxu0
    %v327 = vadd.f32 0.0, %v326
    %v328 = vpop.f32.mrb[0].mxu0
    %v329 = vpop.f32.mrb[0].mxu0
    %v330 = vadd.f32 0.0, %v329
    %v331 = vpop.f32.mrb[0].mxu0
    %332 = vdwg.mxu0
    %v333 = vadd.f32 %v108, %v271
    %v334 = vadd.f32 %v109, %v274
    %v335 = vadd.f32 %v110, %v279
    %v336 = vadd.f32 %v111, %v282
    %v337 = vadd.f32 %v112, %v287
    %v338 = vadd.f32 %v113, %v290
    %v339 = vadd.f32 %v114, %v295
    %v340 = vadd.f32 %v115, %v298
    %v341 = vadd.f32 %v116, %v303
    %v342 = vadd.f32 %v117, %v306
    %v343 = vadd.f32 %v118, %v311
    %v344 = vadd.f32 %v119, %v314
    %v345 = vadd.f32 %v120, %v319
    %v346 = vadd.f32 %v121, %v322
    %v347 = vadd.f32 %v122, %v327
    %v348 = vadd.f32 %v123, %v330
    %349 = vst [vmem:[#allocation2] sm:$0xff] %v333
    %350 = vst [vmem:[#allocation2 + $0x8] sm:$0xff] %v334
    %351 = vst [vmem:[#allocation2 + $0x10] sm:$0xff] %v335
    %352 = vst [vmem:[#allocation2 + $0x18] sm:$0xff] %v336
    %353 = vst [vmem:[#allocation2 + $0x20] sm:$0xff] %v337
    %354 = vst [vmem:[#allocation2 + $0x28] sm:$0xff] %v338
    %355 = vst [vmem:[#allocation2 + $0x30] sm:$0xff] %v339
    %356 = vst [vmem:[#allocation2 + $0x38] sm:$0xff] %v340
    %357 = vst [vmem:[#allocation2 + $0x40] sm:$0xff] %v341
    %358 = vst [vmem:[#allocation2 + $0x48] sm:$0xff] %v342
    %359 = vst [vmem:[#allocation2 + $0x50] sm:$0xff] %v343
    %360 = vst [vmem:[#allocation2 + $0x58] sm:$0xff] %v344
    %361 = vst [vmem:[#allocation2 + $0x60] sm:$0xff] %v345
    %362 = vst [vmem:[#allocation2 + $0x68] sm:$0xff] %v346
    %363 = vst [vmem:[#allocation2 + $0x70] sm:$0xff] %v347
    %364 = vst [vmem:[#allocation2 + $0x78] sm:$0xff] %v348
    // Predicated region
    $region38: #{fwd.2} parent=1 // pred_check
      %p365 = pneg %p72
    $region39: #{fwd.2} parent=1 // pred_check_branch
      %367 = sbr.rel (%p365) target = $region41
    $region40: #{fwd.2} parent=1 // pred_region
      %v368 = vld [vmem:[#allocation2] sm:$0xff]
      %v369 = vld [vmem:[#allocation2 + $0x8] sm:$0xff]
      %v370 = vld [vmem:[#allocation2 + $0x10] sm:$0xff]
      %v371 = vld [vmem:[#allocation2 + $0x18] sm:$0xff]
      %v372 = vld [vmem:[#allocation2 + $0x20] sm:$0xff]
      %v373 = vld [vmem:[#allocation2 + $0x28] sm:$0xff]
      %v374 = vld [vmem:[#allocation2 + $0x30] sm:$0xff]
      %v375 = vld [vmem:[#allocation2 + $0x38] sm:$0xff]
      %v376 = vld [vmem:[#allocation2 + $0x40] sm:$0xff]
      %v377 = vld [vmem:[#allocation2 + $0x48] sm:$0xff]
      %v378 = vld [vmem:[#allocation2 + $0x50] sm:$0xff]
      %v379 = vld [vmem:[#allocation2 + $0x58] sm:$0xff]
      %v380 = vld [vmem:[#allocation2 + $0x60] sm:$0xff]
      %v381 = vld [vmem:[#allocation2 + $0x68] sm:$0xff]
      %v382 = vld [vmem:[#allocation2 + $0x70] sm:$0xff]
      %v383 = vld [vmem:[#allocation2 + $0x78] sm:$0xff]
      %v384 = vpack.c.bf16 %v369, %v368
      %v385 = vpack.c.bf16 %v371, %v370
      %v386 = vpack.c.bf16 %v373, %v372
      %v387 = vpack.c.bf16 %v375, %v374
      %v388 = vpack.c.bf16 %v377, %v376
      %v389 = vpack.c.bf16 %v379, %v378
      %v390 = vpack.c.bf16 %v381, %v380
      %v391 = vpack.c.bf16 %v383, %v382
      %v392 = vld [vmem:[#allocation8] sm:$0xf]
      %v393 = vld [vmem:[#allocation8 + $0x4] sm:$0xf]
      %v394 = vld [vmem:[#allocation8 + $0x8] sm:$0xf]
      %v395 = vld [vmem:[#allocation8 + $0xc] sm:$0xf]
      %v396 = vld [vmem:[#allocation8 + $0x10] sm:$0xf]
      %v397 = vld [vmem:[#allocation8 + $0x14] sm:$0xf]
      %v398 = vld [vmem:[#allocation8 + $0x18] sm:$0xf]
      %v399 = vld [vmem:[#allocation8 + $0x1c] sm:$0xf]
      %v400 = vld [vmem:[#allocation8 + $0x20] sm:$0xf]
      %v401 = vld [vmem:[#allocation8 + $0x24] sm:$0xf]
      %v402 = vld [vmem:[#allocation8 + $0x28] sm:$0xf]
      %v403 = vld [vmem:[#allocation8 + $0x2c] sm:$0xf]
      %v404 = vld [vmem:[#allocation8 + $0x30] sm:$0xf]
      %v405 = vld [vmem:[#allocation8 + $0x34] sm:$0xf]
      %v406 = vld [vmem:[#allocation8 + $0x38] sm:$0xf]
      %v407 = vld [vmem:[#allocation8 + $0x3c] sm:$0xf]
      %v408 = vld [vmem:[#allocation9] sm:$0x1]
      %v410 = vlaneseq
      %v411 = vshrl.u32 %v410, 7
      %v412 = vsub.s32 0, %v411
      %v413 = vrot.slane %v408, %v412
      %v431 = vunpack.c.l.b16 %v392
      %v432 = vunpack.c.l.b16 %v393
      %v433 = vunpack.c.l.b16 %v394
      %v434 = vunpack.c.l.b16 %v395
      %v435 = vunpack.c.l.b16 %v396
      %v436 = vunpack.c.l.b16 %v397
      %v437 = vunpack.c.l.b16 %v398
      %v438 = vunpack.c.l.b16 %v399
      %v439 = vunpack.c.l.b16 %v400
      %v440 = vunpack.c.l.b16 %v401
      %v441 = vunpack.c.l.b16 %v402
      %v442 = vunpack.c.l.b16 %v403
      %v443 = vunpack.c.l.b16 %v404
      %v444 = vunpack.c.l.b16 %v405
      %v445 = vunpack.c.l.b16 %v406
      %v446 = vunpack.c.l.b16 %v407
      %v447 = vpack.c.b16 %v432, %v431
      %v448 = vpack.c.b16 %v434, %v433
      %v449 = vpack.c.b16 %v436, %v435
      %v450 = vpack.c.b16 %v438, %v437
      %v451 = vpack.c.b16 %v440, %v439
      %v452 = vpack.c.b16 %v442, %v441
      %v453 = vpack.c.b16 %v444, %v443
      %v454 = vpack.c.b16 %v446, %v445
      %463 = vmatprep.subr.bf16.mxu0 0
      %464 = vmatpush1.bf16.msra.mxu0 %v447
      %465 = vmatprep.subr.bf16.mxu0 0
      %466 = vmatpush1.bf16.msra.mxu0 %v448
      %467 = vmatprep.subr.bf16.mxu0 0
      %468 = vmatpush1.bf16.msra.mxu0 %v449
      %469 = vmatprep.subr.bf16.mxu0 0
      %470 = vmatpush1.bf16.msra.mxu0 %v450
      %471 = vmatprep.subr.bf16.mxu0 0
      %472 = vmatpush1.bf16.msra.mxu0 %v451
      %473 = vmatprep.subr.bf16.mxu0 0
      %474 = vmatpush1.bf16.msra.mxu0 %v452
      %475 = vmatprep.subr.bf16.mxu0 0
      %476 = vmatpush1.bf16.msra.mxu0 %v453
      %477 = vmatprep.subr.bf16.mxu0 0
      %478 = vmatpush1.bf16.msra.mxu0 %v454
      %479 = vmatprep.subr.bf16.mxu0 0
      %480 = vmatpush1.bf16.msra.mxu0 0
      %481 = vmatprep.subr.bf16.mxu0 0
      %482 = vmatpush1.bf16.msra.mxu0 0
      %483 = vmatprep.subr.bf16.mxu0 0
      %484 = vmatpush1.bf16.msra.mxu0 0
      %485 = vmatprep.subr.bf16.mxu0 0
      %486 = vmatpush1.bf16.msra.mxu0 0
      %487 = vmatprep.subr.bf16.mxu0 0
      %488 = vmatpush1.bf16.msra.mxu0 0
      %489 = vmatprep.subr.bf16.mxu0 0
      %490 = vmatpush1.bf16.msra.mxu0 0
      %491 = vmatprep.subr.bf16.mxu0 0
      %492 = vmatpush1.bf16.msra.mxu0 0
      %493 = vmatprep.subr.bf16.mxu0 0
      %494 = vmatpush1.bf16.msra.mxu0 0
      %495 = vmatprep.mubr.bf16.mxu0 0
      %496 = vmatmul.mubr.bf16.gmra.mrb[0].mxu0 %v384
      %v497 = vpop.f32.mrb[0].mxu0
      %v498 = vadd.f32 %v413, %v497
      %v499 = vpop.f32.mrb[0].mxu0
      %v500 = vpop.f32.mrb[0].mxu0
      %v501 = vadd.f32 %v413, %v500
      %v502 = vpop.f32.mrb[0].mxu0
      %503 = vmatprep.mubr.bf16.mxu0 0
      %504 = vmatmul.mubr.bf16.gmra.mrb[0].mxu0 %v385
      %v505 = vpop.f32.mrb[0].mxu0
      %v506 = vadd.f32 %v413, %v505
      %v507 = vpop.f32.mrb[0].mxu0
      %v508 = vpop.f32.mrb[0].mxu0
      %v509 = vadd.f32 %v413, %v508
      %v510 = vpop.f32.mrb[0].mxu0
      %511 = vmatprep.mubr.bf16.mxu0 0
      %512 = vmatmul.mubr.bf16.gmra.mrb[0].mxu0 %v386
      %v513 = vpop.f32.mrb[0].mxu0
      %v514 = vadd.f32 %v413, %v513
      %v515 = vpop.f32.mrb[0].mxu0
      %v516 = vpop.f32.mrb[0].mxu0
      %v517 = vadd.f32 %v413, %v516
      %v518 = vpop.f32.mrb[0].mxu0
      %519 = vmatprep.mubr.bf16.mxu0 0
      %520 = vmatmul.mubr.bf16.gmra.mrb[0].mxu0 %v387
      %v521 = vpop.f32.mrb[0].mxu0
      %v522 = vadd.f32 %v413, %v521
      %v523 = vpop.f32.mrb[0].mxu0
      %v524 = vpop.f32.mrb[0].mxu0
      %v525 = vadd.f32 %v413, %v524
      %v526 = vpop.f32.mrb[0].mxu0
      %527 = vmatprep.mubr.bf16.mxu0 0
      %528 = vmatmul.mubr.bf16.gmra.mrb[0].mxu0 %v388
      %v529 = vpop.f32.mrb[0].mxu0
      %v530 = vadd.f32 %v413, %v529
      %v531 = vpop.f32.mrb[0].mxu0
      %v532 = vpop.f32.mrb[0].mxu0
      %v533 = vadd.f32 %v413, %v532
      %v534 = vpop.f32.mrb[0].mxu0
      %535 = vmatprep.mubr.bf16.mxu0 0
      %536 = vmatmul.mubr.bf16.gmra.mrb[0].mxu0 %v389
      %v537 = vpop.f32.mrb[0].mxu0
      %v538 = vadd.f32 %v413, %v537
      %v539 = vpop.f32.mrb[0].mxu0
      %v540 = vpop.f32.mrb[0].mxu0
      %v541 = vadd.f32 %v413, %v540
      %v542 = vpop.f32.mrb[0].mxu0
      %543 = vmatprep.mubr.bf16.mxu0 0
      %544 = vmatmul.mubr.bf16.gmra.mrb[0].mxu0 %v390
      %v545 = vpop.f32.mrb[0].mxu0
      %v546 = vadd.f32 %v413, %v545
      %v547 = vpop.f32.mrb[0].mxu0
      %v548 = vpop.f32.mrb[0].mxu0
      %v549 = vadd.f32 %v413, %v548
      %v550 = vpop.f32.mrb[0].mxu0
      %551 = vmatprep.mubr.bf16.mxu0 0
      %552 = vmatmul.mubr.bf16.gmra.mrb[0].mxu0 %v391
      %v553 = vpop.f32.mrb[0].mxu0
      %v554 = vadd.f32 %v413, %v553
      %v555 = vpop.f32.mrb[0].mxu0
      %v556 = vpop.f32.mrb[0].mxu0
      %v557 = vadd.f32 %v413, %v556
      %v558 = vpop.f32.mrb[0].mxu0
      %559 = vdwg.mxu0
      %v560 = vmax.f32 %v498, 0.0
      %v561 = vmax.f32 %v501, 0.0
      %v562 = vmax.f32 %v506, 0.0
      %v563 = vmax.f32 %v509, 0.0
      %v564 = vmax.f32 %v514, 0.0
      %v565 = vmax.f32 %v517, 0.0
      %v566 = vmax.f32 %v522, 0.0
      %v567 = vmax.f32 %v525, 0.0
      %v568 = vmax.f32 %v530, 0.0
      %v569 = vmax.f32 %v533, 0.0
      %v570 = vmax.f32 %v538, 0.0
      %v571 = vmax.f32 %v541, 0.0
      %v572 = vmax.f32 %v546, 0.0
      %v573 = vmax.f32 %v549, 0.0
      %v574 = vmax.f32 %v554, 0.0
      %v575 = vmax.f32 %v557, 0.0
      %v576 = vpack.c.bf16 %v561, %v560
      %v577 = vpack.c.bf16 %v563, %v562
      %v578 = vpack.c.bf16 %v565, %v564
      %v579 = vpack.c.bf16 %v567, %v566
      %v580 = vpack.c.bf16 %v569, %v568
      %v581 = vpack.c.bf16 %v571, %v570
      %v582 = vpack.c.bf16 %v573, %v572
      %v583 = vpack.c.bf16 %v575, %v574
      %v592 = vunpack.c.l.b16 %v576
      %v593 = vunpack.c.h.b16 %v576
      %v594 = vunpack.c.l.b16 %v577
      %v595 = vunpack.c.h.b16 %v577
      %v596 = vunpack.c.l.b16 %v578
      %v597 = vunpack.c.h.b16 %v578
      %v598 = vunpack.c.l.b16 %v579
      %v599 = vunpack.c.h.b16 %v579
      %v600 = vunpack.c.l.b16 %v580
      %v601 = vunpack.c.h.b16 %v580
      %v602 = vunpack.c.l.b16 %v581
      %v603 = vunpack.c.h.b16 %v581
      %v604 = vunpack.c.l.b16 %v582
      %v605 = vunpack.c.h.b16 %v582
      %v606 = vunpack.c.l.b16 %v583
      %v607 = vunpack.c.h.b16 %v583
      %v608 = vpack.c.b16 %v592, %v592
      %v609 = vpack.c.b16 %v593, %v593
      %v610 = vpack.c.b16 %v594, %v594
      %v611 = vpack.c.b16 %v595, %v595
      %v612 = vpack.c.b16 %v596, %v596
      %v613 = vpack.c.b16 %v597, %v597
      %v614 = vpack.c.b16 %v598, %v598
      %v615 = vpack.c.b16 %v599, %v599
      %v616 = vpack.c.b16 %v600, %v600
      %v617 = vpack.c.b16 %v601, %v601
      %v618 = vpack.c.b16 %v602, %v602
      %v619 = vpack.c.b16 %v603, %v603
      %v620 = vpack.c.b16 %v604, %v604
      %v621 = vpack.c.b16 %v605, %v605
      %v622 = vpack.c.b16 %v606, %v606
      %v623 = vpack.c.b16 %v607, %v607
      %640 = vst [vmem:[#allocation11] sm:$0xf] %v608
      %641 = vst [vmem:[#allocation11 + $0x4] sm:$0xf] %v609
      %642 = vst [vmem:[#allocation11 + $0x8] sm:$0xf] %v610
      %643 = vst [vmem:[#allocation11 + $0xc] sm:$0xf] %v611
      %644 = vst [vmem:[#allocation11 + $0x10] sm:$0xf] %v612
      %645 = vst [vmem:[#allocation11 + $0x14] sm:$0xf] %v613
      %646 = vst [vmem:[#allocation11 + $0x18] sm:$0xf] %v614
      %647 = vst [vmem:[#allocation11 + $0x1c] sm:$0xf] %v615
      %648 = vst [vmem:[#allocation11 + $0x20] sm:$0xf] %v616
      %649 = vst [vmem:[#allocation11 + $0x24] sm:$0xf] %v617
      %650 = vst [vmem:[#allocation11 + $0x28] sm:$0xf] %v618
      %651 = vst [vmem:[#allocation11 + $0x2c] sm:$0xf] %v619
      %652 = vst [vmem:[#allocation11 + $0x30] sm:$0xf] %v620
      %653 = vst [vmem:[#allocation11 + $0x34] sm:$0xf] %v621
      %654 = vst [vmem:[#allocation11 + $0x38] sm:$0xf] %v622
      %655 = vst [vmem:[#allocation11 + $0x3c] sm:$0xf] %v623
    $region41: #{fwd.2} parent=1 // pred_fallthru
      _
    // Predicated region
    $region42: #{fwd.2} parent=1 // pred_check
      _
    $region43: #{fwd.2} parent=1 // pred_check_branch
      %657 = sbr.rel (0) target = $region45
    $region44: #{fwd.2} parent=1 // pred_region
      %s659 = ssub.s32 1024, 1024
      %660 = vsyncadd [#allocation5], %s659
      %s661 = sshll.u32 [#allocation11], 4
      %s662 = int_to_ptr.vmem [resolvable:$true] %s661
      %667 = dma.vmem_to_hbm [thread:$0]  %s662, 1024, %s4, [#allocation5], 64, 64, 4
    $region45: #{fwd.2} parent=1 // pred_fallthru
      _
    // Predicated region
    $region46: #{fwd.2} parent=1 // pred_check
      _
    $region47: #{fwd.2} parent=1 // pred_check_branch
      %669 = sbr.rel (0) target = $region49
    $region48: #{fwd.2} parent=1 // pred_region
      %670 = dma.done [#allocation5], 1024
    $region49: #{fwd.2} parent=1 // pred_fallthru
      _
    %671 = vsyncpa [#allocation4], 1
    %672 = vsyncpa [#allocation7], 1
    %673 = vsyncpa [#allocation10], 1
    %674 = vsyncpa [#allocation5], 1

</llo_original>
